<compile_context>
chip_gen: v6e
topology: v6e:2x2x1
jax: 0.10.0
libtpu: 0.0.40
codegen_flags: <defaults>
</compile_context>

<pallas_src>
import functools

import jax
import jax.numpy as jnp
from jax.experimental import pallas as pl
from jax.experimental.pallas import tpu as pltpu  # noqa: F401


# ----------------------------------------------------------------------------
# Single fused kernel for the whole forward pass.
# ----------------------------------------------------------------------------
def _fused_forward_kernel(*refs, n_emb, emb_acts, n_hi, hi_acts, Bp, T, L, H):
    it = iter(refs)
    x_ref = next(it)                                  # [T*Bp, D_in] f32, time-major, batch padded
    emb_refs = [next(it) for _ in range(2 * n_emb)]   # pairs (w bf16 [din,dout], b f32 [1,dout])
    hi_refs = [next(it) for _ in range(2 * n_hi)]     # fused-over-L pairs (w bf16, b f32)
    wih0_ref = next(it)                               # bf16 [E, 3H]  layer-0 input proj (r|z|n)
    bih0_ref = next(it)                               # f32  [1, 3H]
    whh0_ref = next(it)                               # bf16 [H, 3H]  layer-0 hidden proj (r|z|n)
    bhh0_ref = next(it)                               # f32  [1, 3H]
    if L > 1:
        wup_ref = next(it)                            # bf16 [L-1, 2H, 4H]
        bup_ref = next(it)                            # f32  [L-1, 1, 4H]
    wc_ref = next(it)                                 # bf16 [H, Cpad]  (lclf || rclf, lane-padded)
    bc_ref = next(it)                                 # f32  [1, Cpad]
    out_ref = next(it)                                # f32  [T*Bp, Cpad]

    f32 = jnp.float32
    bf16 = jnp.bfloat16

    # ---- 1) pose embedder, time-parallel over all T*Bp frames ----------------
    h = x_ref[...]
    for i in range(n_emb):
        h = jnp.dot(h.astype(bf16), emb_refs[2 * i][...], preferred_element_type=f32)
        h = h + emb_refs[2 * i + 1][...]
        if emb_acts[i] == "relu":
            h = jnp.maximum(h, 0.0)
    emb = h                                            # [T*Bp, E]

    # ---- 2) per-layer h0 from the embedded frame t=0 (L MLPs fused) ----------
    hcur = emb[0:Bp, :]                                # sublane-aligned slice
    for i in range(n_hi):
        hcur = jnp.dot(hcur.astype(bf16), hi_refs[2 * i][...], preferred_element_type=f32)
        hcur = hcur + hi_refs[2 * i + 1][...]
        if hi_acts[i] == "relu":
            hcur = jnp.maximum(hcur, 0.0)
    h_state = [hcur[:, l * H:(l + 1) * H] for l in range(L)]   # L x [Bp, H]

    # ---- 3) hoisted, gate-fused layer-0 input projection over ALL steps ------
    gi0 = jnp.dot(emb.astype(bf16), wih0_ref[...], preferred_element_type=f32) + bih0_ref[...]
    # gi0: [T*Bp, 3H]; per-step slices are sublane-aligned because Bp % 8 == 0

    # ---- 4) hoist weight loads & bias broadcasts out of the time loop --------
    whh0 = whh0_ref[...]
    bhh0 = jnp.broadcast_to(bhh0_ref[...], (Bp, 3 * H))
    if L > 1:
        wups = [wup_ref[l] for l in range(L - 1)]
        bups = [jnp.broadcast_to(bup_ref[l], (Bp, 4 * H)) for l in range(L - 1)]

    # ---- 5) sequential GRU recurrence: 1 fused matmul per layer per step -----
    # PyTorch nn.GRU: r,z = sigmoid(gi+gh); n = tanh(gi_n + r*gh_n);
    # h' = (1-z)*n + z*h.
    h_collect = []
    for t in range(T):
        r0 = t * Bp
        gi = gi0[r0:r0 + Bp, :]                        # [Bp, 3H] aligned slice
        hp = h_state[0]
        gh = jnp.dot(hp.astype(bf16), whh0, preferred_element_type=f32) + bhh0
        s = gi + gh
        r = jax.nn.sigmoid(s[:, 0:H])
        z = jax.nn.sigmoid(s[:, H:2 * H])
        n = jnp.tanh(gi[:, 2 * H:3 * H] + r * gh[:, 2 * H:3 * H])
        h_new = (1.0 - z) * n + z * hp
        h_state[0] = h_new
        inp = h_new
        for l in range(1, L):
            hp = h_state[l]
            cat = jnp.concatenate([inp, hp], axis=1)   # [Bp, 2H]
            g = jnp.dot(cat.astype(bf16), wups[l - 1], preferred_element_type=f32) + bups[l - 1]
            # columns: [gi_r+gh_r | gi_z+gh_z | gi_n | gh_n]
            r = jax.nn.sigmoid(g[:, 0:H])
            z = jax.nn.sigmoid(g[:, H:2 * H])
            n = jnp.tanh(g[:, 2 * H:3 * H] + r * g[:, 3 * H:4 * H])
            h_new = (1.0 - z) * n + z * hp
            h_state[l] = h_new
            inp = h_new
        h_collect.append(inp)                          # register-resident, no VMEM scratch

    # ---- 6) merged + lane-padded classifier: one matmul, one slab store ------
    hl = jnp.concatenate(h_collect, axis=0)            # [T*Bp, H], time-major rows
    act = jnp.dot(hl.astype(bf16), wc_ref[...], preferred_element_type=f32) + bc_ref[...]
    out_ref[...] = act.astype(out_ref.dtype)


# ----------------------------------------------------------------------------
# Parameter construction (arrays only -> valid jit pytree; activations static)
# ----------------------------------------------------------------------------
def make_params(key, *, d_in, pose_encoder_units, rnn_units, hi_units, num_actions):
    def nrm(k, shape):
        return jax.random.normal(k, shape, jnp.float32) * 0.1

    keys = iter(jax.random.split(key, 128))
    params = {}

    # pose_embedder: make_mlp(pose_encoder_units, pose_encoder_activations)
    units = list(pose_encoder_units)
    units[0] = d_in
    emb_w, emb_b = [], []
    for i in range(len(units) - 1):
        emb_w.append(nrm(next(keys), (units[i], units[i + 1])))
        emb_b.append(nrm(next(keys), (1, units[i + 1])))
    params["emb_w"], params["emb_b"] = emb_w, emb_b

    E, H, L = rnn_units[0], rnn_units[1], rnn_units[2]
    assert E == H, "stacked GRU weight layout requires input size == hidden size"

    # nn.GRU(E, H, L) weights stored gate-separated: [L, 3(r,z,n), in, H]
    params["gru_wih"] = jnp.stack(
        [jnp.stack([nrm(next(keys), (E, H)) for _ in range(3)]) for _ in range(L)])
    params["gru_whh"] = jnp.stack(
        [jnp.stack([nrm(next(keys), (H, H)) for _ in range(3)]) for _ in range(L)])
    params["gru_bih"] = jnp.stack(
        [jnp.stack([nrm(next(keys), (1, H)) for _ in range(3)]) for _ in range(L)])
    params["gru_bhh"] = jnp.stack(
        [jnp.stack([nrm(next(keys), (1, H)) for _ in range(3)]) for _ in range(L)])

    # pose_encoder_hi: L identical-shape MLPs, weights stacked over L per MLP layer
    hi_w, hi_b = [], []
    for i in range(len(hi_units) - 1):
        hi_w.append(jnp.stack([nrm(next(keys), (hi_units[i], hi_units[i + 1]))
                               for _ in range(L)]))
        hi_b.append(jnp.stack([nrm(next(keys), (1, hi_units[i + 1]))
                               for _ in range(L)]))
    params["hi_w"], params["hi_b"] = hi_w, hi_b

    # merged classifier: lclf || rclf -> [H, 2A], bias [1, 2A]
    params["clf_w"] = jnp.concatenate(
        [nrm(next(keys), (H, num_actions)), nrm(next(keys), (H, num_actions))], axis=1)
    params["clf_b"] = jnp.concatenate(
        [nrm(next(keys), (1, num_actions)), nrm(next(keys), (1, num_actions))], axis=1)
    return params


# ----------------------------------------------------------------------------
# Forward pass (mirrors model.forward) — one fused pallas_call
# ----------------------------------------------------------------------------
def forward(params, xyz, *, emb_acts, hi_acts):
    f32, bf16 = jnp.float32, jnp.bfloat16

    B, T = xyz.shape[0], xyz.shape[1]
    x = xyz.reshape(B, T, -1)                          # [B, T, J*3]
    d_in = x.shape[-1]

    L = params["gru_wih"].shape[0]
    H = params["gru_wih"].shape[-1]
    A = params["clf_w"].shape[-1] // 2

    # Pad batch to a full sublane group so every per-timestep slice inside the
    # kernel is (8,*)-aligned; padded rows carry garbage and are dropped below.
    Bp = ((B + 7) // 8) * 8
    x_tm = jnp.transpose(x, (1, 0, 2))                 # [T, B, D_in]
    x_tm = jnp.pad(x_tm, ((0, 0), (0, Bp - B), (0, 0)))
    x_tm = x_tm.reshape(T * Bp, d_in).astype(f32)

    # pose embedder weights (bf16 matrices, f32 biases)
    n_emb = len(params["emb_w"])
    emb_flat = []
    for w, b in zip(params["emb_w"], params["emb_b"]):
        emb_flat += [w.astype(bf16), b]

    # fuse the L identical pose_encoder_hi MLPs:
    #   layer 0: lane-stack -> [din, L*dout] (same input for every MLP)
    #   layer i>0: block-diagonal -> [L*din, L*dout]
    n_hi = len(params["hi_w"])
    hi_flat = []
    for i, (ws, bs) in enumerate(zip(params["hi_w"], params["hi_b"])):
        Lh, din, dout = ws.shape
        if i == 0:
            wf = jnp.concatenate([ws[l] for l in range(Lh)], axis=1)
        else:
            wf = jnp.zeros((Lh * din, Lh * dout), f32)
            for l in range(Lh):
                wf = wf.at[l * din:(l + 1) * din, l * dout:(l + 1) * dout].set(ws[l])
        bf_ = jnp.concatenate([bs[l] for l in range(Lh)], axis=1)
        hi_flat += [wf.astype(bf16), bf_]

    # gate-fused GRU weights (gate order r, z, n)
    wih, whh = params["gru_wih"], params["gru_whh"]    # [L, 3, in, H]
    bih, bhh = params["gru_bih"], params["gru_bhh"]    # [L, 3, 1, H]
    wih0_f = jnp.concatenate([wih[0, g] for g in range(3)], axis=1).astype(bf16)   # [E, 3H]
    bih0_f = jnp.concatenate([bih[0, g] for g in range(3)], axis=1)                # [1, 3H]
    whh0_f = jnp.concatenate([whh[0, g] for g in range(3)], axis=1).astype(bf16)   # [H, 3H]
    bhh0_f = jnp.concatenate([bhh[0, g] for g in range(3)], axis=1)                # [1, 3H]

    gru_upper = []
    if L > 1:
        zeros = jnp.zeros((H, H), f32)
        wu, bu = [], []
        for l in range(1, L):
            top = jnp.concatenate([wih[l, 0], wih[l, 1], wih[l, 2], zeros], axis=1)  # [H, 4H]
            bot = jnp.concatenate([whh[l, 0], whh[l, 1], zeros, whh[l, 2]], axis=1)  # [H, 4H]
            wu.append(jnp.concatenate([top, bot], axis=0))                           # [2H, 4H]
            bu.append(jnp.concatenate(
                [bih[l, 0] + bhh[l, 0], bih[l, 1] + bhh[l, 1], bih[l, 2], bhh[l, 2]],
                axis=1))                                                              # [1, 4H]
        gru_upper = [jnp.stack(wu).astype(bf16), jnp.stack(bu)]

    # merged classifier, lane-padded to a multiple of 128 so the single output
    # slab store is unmasked (lane-dense out rule)
    Cpad = ((2 * A + 127) // 128) * 128
    wc = jnp.pad(params["clf_w"], ((0, 0), (0, Cpad - 2 * A))).astype(bf16)
    bc = jnp.pad(params["clf_b"], ((0, 0), (0, Cpad - 2 * A)))

    kernel = functools.partial(
        _fused_forward_kernel,
        n_emb=n_emb, emb_acts=tuple(emb_acts),
        n_hi=n_hi, hi_acts=tuple(hi_acts),
        Bp=Bp, T=T, L=L, H=H)

    out = pl.pallas_call(
        kernel,
        out_shape=jax.ShapeDtypeStruct((T * Bp, Cpad), f32),
    )(x_tm, *emb_flat, *hi_flat,
      wih0_f, bih0_f, whh0_f, bhh0_f, *gru_upper, wc, bc)

    # Wrapper-side plumbing on a ~KB tensor: drop batch/lane padding, go
    # time-major -> batch-major, split left/right heads.
    act = out.reshape(T, Bp, Cpad)[:, :B, :2 * A]
    act = jnp.transpose(act, (1, 0, 2))                # [B, T, 2A]
    lact, ract = act[:, :, :A], act[:, :, A:]

    # TODO(synk): reform_data(...) used by the reference is not defined in the
    # reference source; raw per-frame classifier logits are returned instead.
    return {"lhand_action_ids": lact, "rhand_action_ids": ract}


# ----------------------------------------------------------------------------
if __name__ == "__main__":
    # small config consistent with the module's __init__
    B, T, J = 2, 8, 5
    D_IN = J * 3                                   # 15
    E = H = 32                                     # GRU input / hidden
    L = 2                                          # GRU layers
    NUM_ACTIONS = 8

    key = jax.random.PRNGKey(0)
    k_data, k_param = jax.random.split(key)

    xyz = jax.random.normal(k_data, (B, T, J, 3), jnp.float32)

    params = make_params(
        k_param,
        d_in=D_IN,
        pose_encoder_units=[D_IN, 32, E],
        rnn_units=[E, H, L],
        hi_units=[E, H],
        num_actions=NUM_ACTIONS,
    )

    fwd = jax.jit(functools.partial(
        forward, emb_acts=("relu", "relu"), hi_acts=("relu",)))

    out = fwd(params, xyz)
    jax.block_until_ready(out["lhand_action_ids"])
    jax.block_until_ready(out["rhand_action_ids"])

    assert out["lhand_action_ids"].shape == (B, T, NUM_ACTIONS)
    assert out["rhand_action_ids"].shape == (B, T, NUM_ACTIONS)
    assert bool(jnp.all(jnp.isfinite(out["lhand_action_ids"])))
    assert bool(jnp.all(jnp.isfinite(out["rhand_action_ids"])))
    print("KERNEL_OK")
</pallas_src>

<mosaic_0001>
module attributes {stable_mosaic.version = 11 : i64} {
  func.func @_fused_forward_kernel(%arg0: memref<64x15xf32, #tpu.memory_space<vmem>>, %arg1: memref<15x32xbf16, #tpu.memory_space<vmem>>, %arg2: memref<1x32xf32, #tpu.memory_space<vmem>>, %arg3: memref<32x32xbf16, #tpu.memory_space<vmem>>, %arg4: memref<1x32xf32, #tpu.memory_space<vmem>>, %arg5: memref<32x64xbf16, #tpu.memory_space<vmem>>, %arg6: memref<1x64xf32, #tpu.memory_space<vmem>>, %arg7: memref<32x96xbf16, #tpu.memory_space<vmem>>, %arg8: memref<1x96xf32, #tpu.memory_space<vmem>>, %arg9: memref<32x96xbf16, #tpu.memory_space<vmem>>, %arg10: memref<1x96xf32, #tpu.memory_space<vmem>>, %arg11: memref<1x64x128xbf16, #tpu.memory_space<vmem>>, %arg12: memref<1x1x128xf32, #tpu.memory_space<vmem>>, %arg13: memref<32x128xbf16, #tpu.memory_space<vmem>>, %arg14: memref<1x128xf32, #tpu.memory_space<vmem>>, %arg15: memref<64x128xf32, #tpu.memory_space<vmem>>) attributes {dimension_semantics = [], scalar_prefetch = 0 : i64, scratch_operands = 0 : i64, tpu.core_type = #tpu.core_type<tc>} {
    %c0 = arith.constant 0 : index
    %c0_0 = arith.constant 0 : index
    %0 = vector.load %arg0[%c0, %c0_0] : memref<64x15xf32, #tpu.memory_space<vmem>>, vector<64x15xf32>
    %1 = arith.truncf %0 : vector<64x15xf32> to vector<64x15xbf16>
    %c0_1 = arith.constant 0 : index
    %c0_2 = arith.constant 0 : index
    %2 = vector.load %arg1[%c0_1, %c0_2] : memref<15x32xbf16, #tpu.memory_space<vmem>>, vector<15x32xbf16>
    %cst = arith.constant dense<0.000000e+00> : vector<64x32xf32>
    %3 = tpu.matmul %1, %2, %cst {dimension_numbers = #tpu.dot_dimension_numbers<[1], [0], [0], [1], [0, 0, 1, 1], [], []>} : vector<64x15xbf16>, vector<15x32xbf16>, vector<64x32xf32> -> vector<64x32xf32>
    %c0_3 = arith.constant 0 : index
    %c0_4 = arith.constant 0 : index
    %4 = vector.load %arg2[%c0_3, %c0_4] : memref<1x32xf32, #tpu.memory_space<vmem>>, vector<1x32xf32>
    %5 = vector.broadcast %4 : vector<1x32xf32> to vector<64x32xf32>
    %6 = arith.addf %3, %5 : vector<64x32xf32>
    %cst_5 = arith.constant 0.000000e+00 : f32
    %7 = vector.broadcast %cst_5 : f32 to vector<64x32xf32>
    %8 = arith.maximumf %6, %7 : vector<64x32xf32>
    %9 = arith.truncf %8 : vector<64x32xf32> to vector<64x32xbf16>
    %c0_6 = arith.constant 0 : index
    %c0_7 = arith.constant 0 : index
    %10 = vector.load %arg3[%c0_6, %c0_7] : memref<32x32xbf16, #tpu.memory_space<vmem>>, vector<32x32xbf16>
    %cst_8 = arith.constant dense<0.000000e+00> : vector<64x32xf32>
    %11 = tpu.matmul %9, %10, %cst_8 {dimension_numbers = #tpu.dot_dimension_numbers<[1], [0], [0], [1], [0, 0, 1, 1], [], []>} : vector<64x32xbf16>, vector<32x32xbf16>, vector<64x32xf32> -> vector<64x32xf32>
    %c0_9 = arith.constant 0 : index
    %c0_10 = arith.constant 0 : index
    %12 = vector.load %arg4[%c0_9, %c0_10] : memref<1x32xf32, #tpu.memory_space<vmem>>, vector<1x32xf32>
    %13 = vector.broadcast %12 : vector<1x32xf32> to vector<64x32xf32>
    %14 = arith.addf %11, %13 : vector<64x32xf32>
    %cst_11 = arith.constant 0.000000e+00 : f32
    %15 = vector.broadcast %cst_11 : f32 to vector<64x32xf32>
    %16 = arith.maximumf %14, %15 : vector<64x32xf32>
    %17 = vector.extract_strided_slice %16 {offsets = [0, 0], sizes = [8, 32], strides = [1, 1]} : vector<64x32xf32> to vector<8x32xf32>
    %18 = arith.truncf %17 : vector<8x32xf32> to vector<8x32xbf16>
    %c0_12 = arith.constant 0 : index
    %c0_13 = arith.constant 0 : index
    %19 = vector.load %arg5[%c0_12, %c0_13] : memref<32x64xbf16, #tpu.memory_space<vmem>>, vector<32x64xbf16>
    %cst_14 = arith.constant dense<0.000000e+00> : vector<8x64xf32>
    %20 = tpu.matmul %18, %19, %cst_14 {dimension_numbers = #tpu.dot_dimension_numbers<[1], [0], [0], [1], [0, 0, 1, 1], [], []>} : vector<8x32xbf16>, vector<32x64xbf16>, vector<8x64xf32> -> vector<8x64xf32>
    %c0_15 = arith.constant 0 : index
    %c0_16 = arith.constant 0 : index
    %21 = vector.load %arg6[%c0_15, %c0_16] : memref<1x64xf32, #tpu.memory_space<vmem>>, vector<1x64xf32>
    %22 = vector.broadcast %21 : vector<1x64xf32> to vector<8x64xf32>
    %23 = arith.addf %20, %22 : vector<8x64xf32>
    %cst_17 = arith.constant 0.000000e+00 : f32
    %24 = vector.broadcast %cst_17 : f32 to vector<8x64xf32>
    %25 = arith.maximumf %23, %24 : vector<8x64xf32>
    %26 = vector.extract_strided_slice %25 {offsets = [0, 0], sizes = [8, 32], strides = [1, 1]} : vector<8x64xf32> to vector<8x32xf32>
    %27 = vector.extract_strided_slice %25 {offsets = [0, 32], sizes = [8, 32], strides = [1, 1]} : vector<8x64xf32> to vector<8x32xf32>
    %28 = arith.truncf %16 : vector<64x32xf32> to vector<64x32xbf16>
    %c0_18 = arith.constant 0 : index
    %c0_19 = arith.constant 0 : index
    %29 = vector.load %arg7[%c0_18, %c0_19] : memref<32x96xbf16, #tpu.memory_space<vmem>>, vector<32x96xbf16>
    %cst_20 = arith.constant dense<0.000000e+00> : vector<64x96xf32>
    %30 = tpu.matmul %28, %29, %cst_20 {dimension_numbers = #tpu.dot_dimension_numbers<[1], [0], [0], [1], [0, 0, 1, 1], [], []>} : vector<64x32xbf16>, vector<32x96xbf16>, vector<64x96xf32> -> vector<64x96xf32>
    %c0_21 = arith.constant 0 : index
    %c0_22 = arith.constant 0 : index
    %31 = vector.load %arg8[%c0_21, %c0_22] : memref<1x96xf32, #tpu.memory_space<vmem>>, vector<1x96xf32>
    %32 = vector.broadcast %31 : vector<1x96xf32> to vector<64x96xf32>
    %33 = arith.addf %30, %32 : vector<64x96xf32>
    %c0_23 = arith.constant 0 : index
    %c0_24 = arith.constant 0 : index
    %34 = vector.load %arg9[%c0_23, %c0_24] : memref<32x96xbf16, #tpu.memory_space<vmem>>, vector<32x96xbf16>
    %c0_25 = arith.constant 0 : index
    %c0_26 = arith.constant 0 : index
    %35 = vector.load %arg10[%c0_25, %c0_26] : memref<1x96xf32, #tpu.memory_space<vmem>>, vector<1x96xf32>
    %36 = vector.shape_cast %35 : vector<1x96xf32> to vector<1x96xf32>
    %37 = vector.broadcast %36 : vector<1x96xf32> to vector<8x96xf32>
    %c0_27 = arith.constant 0 : index
    %c0_28 = arith.constant 0 : index
    %c0_29 = arith.constant 0 : index
    %38 = vector.load %arg11[%c0_27, %c0_28, %c0_29] : memref<1x64x128xbf16, #tpu.memory_space<vmem>>, vector<1x64x128xbf16>
    %39 = vector.shape_cast %38 : vector<1x64x128xbf16> to vector<64x128xbf16>
    %c0_30 = arith.constant 0 : index
    %c0_31 = arith.constant 0 : index
    %c0_32 = arith.constant 0 : index
    %40 = vector.load %arg12[%c0_30, %c0_31, %c0_32] : memref<1x1x128xf32, #tpu.memory_space<vmem>>, vector<1x1x128xf32>
    %41 = vector.shape_cast %40 : vector<1x1x128xf32> to vector<1x128xf32>
    %42 = vector.shape_cast %41 : vector<1x128xf32> to vector<1x128xf32>
    %43 = vector.broadcast %42 : vector<1x128xf32> to vector<8x128xf32>
    %44 = vector.extract_strided_slice %33 {offsets = [0, 0], sizes = [8, 96], strides = [1, 1]} : vector<64x96xf32> to vector<8x96xf32>
    %45 = arith.truncf %26 : vector<8x32xf32> to vector<8x32xbf16>
    %cst_33 = arith.constant dense<0.000000e+00> : vector<8x96xf32>
    %46 = tpu.matmul %45, %34, %cst_33 {dimension_numbers = #tpu.dot_dimension_numbers<[1], [0], [0], [1], [0, 0, 1, 1], [], []>} : vector<8x32xbf16>, vector<32x96xbf16>, vector<8x96xf32> -> vector<8x96xf32>
    %47 = arith.addf %46, %37 : vector<8x96xf32>
    %48 = arith.addf %44, %47 : vector<8x96xf32>
    %49 = vector.extract_strided_slice %48 {offsets = [0, 0], sizes = [8, 32], strides = [1, 1]} : vector<8x96xf32> to vector<8x32xf32>
    %50 = arith.negf %49 : vector<8x32xf32>
    %51 = math.exp %50 : vector<8x32xf32>
    %cst_34 = arith.constant 1.000000e+00 : f32
    %52 = vector.broadcast %cst_34 : f32 to vector<8x32xf32>
    %53 = arith.addf %52, %51 : vector<8x32xf32>
    %54 = arith.divf %52, %53 : vector<8x32xf32>
    %55 = vector.extract_strided_slice %48 {offsets = [0, 32], sizes = [8, 32], strides = [1, 1]} : vector<8x96xf32> to vector<8x32xf32>
    %56 = arith.negf %55 : vector<8x32xf32>
    %57 = math.exp %56 : vector<8x32xf32>
    %cst_35 = arith.constant 1.000000e+00 : f32
    %58 = vector.broadcast %cst_35 : f32 to vector<8x32xf32>
    %59 = arith.addf %58, %57 : vector<8x32xf32>
    %60 = arith.divf %58, %59 : vector<8x32xf32>
    %61 = vector.extract_strided_slice %44 {offsets = [0, 64], sizes = [8, 32], strides = [1, 1]} : vector<8x96xf32> to vector<8x32xf32>
    %62 = vector.extract_strided_slice %47 {offsets = [0, 64], sizes = [8, 32], strides = [1, 1]} : vector<8x96xf32> to vector<8x32xf32>
    %63 = arith.mulf %54, %62 : vector<8x32xf32>
    %64 = arith.addf %61, %63 : vector<8x32xf32>
    %65 = math.tanh %64 : vector<8x32xf32>
    %cst_36 = arith.constant 1.000000e+00 : f32
    %66 = vector.broadcast %cst_36 : f32 to vector<8x32xf32>
    %67 = arith.subf %66, %60 : vector<8x32xf32>
    %68 = arith.mulf %67, %65 : vector<8x32xf32>
    %69 = arith.mulf %60, %26 : vector<8x32xf32>
    %70 = arith.addf %68, %69 : vector<8x32xf32>
    %71 = tpu.concatenate %70, %27 in 1 : vector<8x32xf32>, vector<8x32xf32> -> vector<8x64xf32>
    %72 = arith.truncf %71 : vector<8x64xf32> to vector<8x64xbf16>
    %cst_37 = arith.constant dense<0.000000e+00> : vector<8x128xf32>
    %73 = tpu.matmul %72, %39, %cst_37 {dimension_numbers = #tpu.dot_dimension_numbers<[1], [0], [0], [1], [0, 0, 1, 1], [], []>} : vector<8x64xbf16>, vector<64x128xbf16>, vector<8x128xf32> -> vector<8x128xf32>
    %74 = arith.addf %73, %43 : vector<8x128xf32>
    %75 = vector.extract_strided_slice %74 {offsets = [0, 0], sizes = [8, 32], strides = [1, 1]} : vector<8x128xf32> to vector<8x32xf32>
    %76 = arith.negf %75 : vector<8x32xf32>
    %77 = math.exp %76 : vector<8x32xf32>
    %cst_38 = arith.constant 1.000000e+00 : f32
    %78 = vector.broadcast %cst_38 : f32 to vector<8x32xf32>
    %79 = arith.addf %78, %77 : vector<8x32xf32>
    %80 = arith.divf %78, %79 : vector<8x32xf32>
    %81 = vector.extract_strided_slice %74 {offsets = [0, 32], sizes = [8, 32], strides = [1, 1]} : vector<8x128xf32> to vector<8x32xf32>
    %82 = arith.negf %81 : vector<8x32xf32>
    %83 = math.exp %82 : vector<8x32xf32>
    %cst_39 = arith.constant 1.000000e+00 : f32
    %84 = vector.broadcast %cst_39 : f32 to vector<8x32xf32>
    %85 = arith.addf %84, %83 : vector<8x32xf32>
    %86 = arith.divf %84, %85 : vector<8x32xf32>
    %87 = vector.extract_strided_slice %74 {offsets = [0, 64], sizes = [8, 32], strides = [1, 1]} : vector<8x128xf32> to vector<8x32xf32>
    %88 = vector.extract_strided_slice %74 {offsets = [0, 96], sizes = [8, 32], strides = [1, 1]} : vector<8x128xf32> to vector<8x32xf32>
    %89 = arith.mulf %80, %88 : vector<8x32xf32>
    %90 = arith.addf %87, %89 : vector<8x32xf32>
    %91 = math.tanh %90 : vector<8x32xf32>
    %cst_40 = arith.constant 1.000000e+00 : f32
    %92 = vector.broadcast %cst_40 : f32 to vector<8x32xf32>
    %93 = arith.subf %92, %86 : vector<8x32xf32>
    %94 = arith.mulf %93, %91 : vector<8x32xf32>
    %95 = arith.mulf %86, %27 : vector<8x32xf32>
    %96 = arith.addf %94, %95 : vector<8x32xf32>
    %97 = vector.extract_strided_slice %33 {offsets = [8, 0], sizes = [8, 96], strides = [1, 1]} : vector<64x96xf32> to vector<8x96xf32>
    %98 = arith.truncf %70 : vector<8x32xf32> to vector<8x32xbf16>
    %cst_41 = arith.constant dense<0.000000e+00> : vector<8x96xf32>
    %99 = tpu.matmul %98, %34, %cst_41 {dimension_numbers = #tpu.dot_dimension_numbers<[1], [0], [0], [1], [0, 0, 1, 1], [], []>} : vector<8x32xbf16>, vector<32x96xbf16>, vector<8x96xf32> -> vector<8x96xf32>
    %100 = arith.addf %99, %37 : vector<8x96xf32>
    %101 = arith.addf %97, %100 : vector<8x96xf32>
    %102 = vector.extract_strided_slice %101 {offsets = [0, 0], sizes = [8, 32], strides = [1, 1]} : vector<8x96xf32> to vector<8x32xf32>
    %103 = arith.negf %102 : vector<8x32xf32>
    %104 = math.exp %103 : vector<8x32xf32>
    %cst_42 = arith.constant 1.000000e+00 : f32
    %105 = vector.broadcast %cst_42 : f32 to vector<8x32xf32>
    %106 = arith.addf %105, %104 : vector<8x32xf32>
    %107 = arith.divf %105, %106 : vector<8x32xf32>
    %108 = vector.extract_strided_slice %101 {offsets = [0, 32], sizes = [8, 32], strides = [1, 1]} : vector<8x96xf32> to vector<8x32xf32>
    %109 = arith.negf %108 : vector<8x32xf32>
    %110 = math.exp %109 : vector<8x32xf32>
    %cst_43 = arith.constant 1.000000e+00 : f32
    %111 = vector.broadcast %cst_43 : f32 to vector<8x32xf32>
    %112 = arith.addf %111, %110 : vector<8x32xf32>
    %113 = arith.divf %111, %112 : vector<8x32xf32>
    %114 = vector.extract_strided_slice %97 {offsets = [0, 64], sizes = [8, 32], strides = [1, 1]} : vector<8x96xf32> to vector<8x32xf32>
    %115 = vector.extract_strided_slice %100 {offsets = [0, 64], sizes = [8, 32], strides = [1, 1]} : vector<8x96xf32> to vector<8x32xf32>
    %116 = arith.mulf %107, %115 : vector<8x32xf32>
    %117 = arith.addf %114, %116 : vector<8x32xf32>
    %118 = math.tanh %117 : vector<8x32xf32>
    %cst_44 = arith.constant 1.000000e+00 : f32
    %119 = vector.broadcast %cst_44 : f32 to vector<8x32xf32>
    %120 = arith.subf %119, %113 : vector<8x32xf32>
    %121 = arith.mulf %120, %118 : vector<8x32xf32>
    %122 = arith.mulf %113, %70 : vector<8x32xf32>
    %123 = arith.addf %121, %122 : vector<8x32xf32>
    %124 = tpu.concatenate %123, %96 in 1 : vector<8x32xf32>, vector<8x32xf32> -> vector<8x64xf32>
    %125 = arith.truncf %124 : vector<8x64xf32> to vector<8x64xbf16>
    %cst_45 = arith.constant dense<0.000000e+00> : vector<8x128xf32>
    %126 = tpu.matmul %125, %39, %cst_45 {dimension_numbers = #tpu.dot_dimension_numbers<[1], [0], [0], [1], [0, 0, 1, 1], [], []>} : vector<8x64xbf16>, vector<64x128xbf16>, vector<8x128xf32> -> vector<8x128xf32>
    %127 = arith.addf %126, %43 : vector<8x128xf32>
    %128 = vector.extract_strided_slice %127 {offsets = [0, 0], sizes = [8, 32], strides = [1, 1]} : vector<8x128xf32> to vector<8x32xf32>
    %129 = arith.negf %128 : vector<8x32xf32>
    %130 = math.exp %129 : vector<8x32xf32>
    %cst_46 = arith.constant 1.000000e+00 : f32
    %131 = vector.broadcast %cst_46 : f32 to vector<8x32xf32>
    %132 = arith.addf %131, %130 : vector<8x32xf32>
    %133 = arith.divf %131, %132 : vector<8x32xf32>
    %134 = vector.extract_strided_slice %127 {offsets = [0, 32], sizes = [8, 32], strides = [1, 1]} : vector<8x128xf32> to vector<8x32xf32>
    %135 = arith.negf %134 : vector<8x32xf32>
    %136 = math.exp %135 : vector<8x32xf32>
    %cst_47 = arith.constant 1.000000e+00 : f32
    %137 = vector.broadcast %cst_47 : f32 to vector<8x32xf32>
    %138 = arith.addf %137, %136 : vector<8x32xf32>
    %139 = arith.divf %137, %138 : vector<8x32xf32>
    %140 = vector.extract_strided_slice %127 {offsets = [0, 64], sizes = [8, 32], strides = [1, 1]} : vector<8x128xf32> to vector<8x32xf32>
    %141 = vector.extract_strided_slice %127 {offsets = [0, 96], sizes = [8, 32], strides = [1, 1]} : vector<8x128xf32> to vector<8x32xf32>
    %142 = arith.mulf %133, %141 : vector<8x32xf32>
    %143 = arith.addf %140, %142 : vector<8x32xf32>
    %144 = math.tanh %143 : vector<8x32xf32>
    %cst_48 = arith.constant 1.000000e+00 : f32
    %145 = vector.broadcast %cst_48 : f32 to vector<8x32xf32>
    %146 = arith.subf %145, %139 : vector<8x32xf32>
    %147 = arith.mulf %146, %144 : vector<8x32xf32>
    %148 = arith.mulf %139, %96 : vector<8x32xf32>
    %149 = arith.addf %147, %148 : vector<8x32xf32>
    %150 = vector.extract_strided_slice %33 {offsets = [16, 0], sizes = [8, 96], strides = [1, 1]} : vector<64x96xf32> to vector<8x96xf32>
    %151 = arith.truncf %123 : vector<8x32xf32> to vector<8x32xbf16>
    %cst_49 = arith.constant dense<0.000000e+00> : vector<8x96xf32>
    %152 = tpu.matmul %151, %34, %cst_49 {dimension_numbers = #tpu.dot_dimension_numbers<[1], [0], [0], [1], [0, 0, 1, 1], [], []>} : vector<8x32xbf16>, vector<32x96xbf16>, vector<8x96xf32> -> vector<8x96xf32>
    %153 = arith.addf %152, %37 : vector<8x96xf32>
    %154 = arith.addf %150, %153 : vector<8x96xf32>
    %155 = vector.extract_strided_slice %154 {offsets = [0, 0], sizes = [8, 32], strides = [1, 1]} : vector<8x96xf32> to vector<8x32xf32>
    %156 = arith.negf %155 : vector<8x32xf32>
    %157 = math.exp %156 : vector<8x32xf32>
    %cst_50 = arith.constant 1.000000e+00 : f32
    %158 = vector.broadcast %cst_50 : f32 to vector<8x32xf32>
    %159 = arith.addf %158, %157 : vector<8x32xf32>
    %160 = arith.divf %158, %159 : vector<8x32xf32>
    %161 = vector.extract_strided_slice %154 {offsets = [0, 32], sizes = [8, 32], strides = [1, 1]} : vector<8x96xf32> to vector<8x32xf32>
    %162 = arith.negf %161 : vector<8x32xf32>
    %163 = math.exp %162 : vector<8x32xf32>
    %cst_51 = arith.constant 1.000000e+00 : f32
    %164 = vector.broadcast %cst_51 : f32 to vector<8x32xf32>
    %165 = arith.addf %164, %163 : vector<8x32xf32>
    %166 = arith.divf %164, %165 : vector<8x32xf32>
    %167 = vector.extract_strided_slice %150 {offsets = [0, 64], sizes = [8, 32], strides = [1, 1]} : vector<8x96xf32> to vector<8x32xf32>
    %168 = vector.extract_strided_slice %153 {offsets = [0, 64], sizes = [8, 32], strides = [1, 1]} : vector<8x96xf32> to vector<8x32xf32>
    %169 = arith.mulf %160, %168 : vector<8x32xf32>
    %170 = arith.addf %167, %169 : vector<8x32xf32>
    %171 = math.tanh %170 : vector<8x32xf32>
    %cst_52 = arith.constant 1.000000e+00 : f32
    %172 = vector.broadcast %cst_52 : f32 to vector<8x32xf32>
    %173 = arith.subf %172, %166 : vector<8x32xf32>
    %174 = arith.mulf %173, %171 : vector<8x32xf32>
    %175 = arith.mulf %166, %123 : vector<8x32xf32>
    %176 = arith.addf %174, %175 : vector<8x32xf32>
    %177 = tpu.concatenate %176, %149 in 1 : vector<8x32xf32>, vector<8x32xf32> -> vector<8x64xf32>
    %178 = arith.truncf %177 : vector<8x64xf32> to vector<8x64xbf16>
    %cst_53 = arith.constant dense<0.000000e+00> : vector<8x128xf32>
    %179 = tpu.matmul %178, %39, %cst_53 {dimension_numbers = #tpu.dot_dimension_numbers<[1], [0], [0], [1], [0, 0, 1, 1], [], []>} : vector<8x64xbf16>, vector<64x128xbf16>, vector<8x128xf32> -> vector<8x128xf32>
    %180 = arith.addf %179, %43 : vector<8x128xf32>
    %181 = vector.extract_strided_slice %180 {offsets = [0, 0], sizes = [8, 32], strides = [1, 1]} : vector<8x128xf32> to vector<8x32xf32>
    %182 = arith.negf %181 : vector<8x32xf32>
    %183 = math.exp %182 : vector<8x32xf32>
    %cst_54 = arith.constant 1.000000e+00 : f32
    %184 = vector.broadcast %cst_54 : f32 to vector<8x32xf32>
    %185 = arith.addf %184, %183 : vector<8x32xf32>
    %186 = arith.divf %184, %185 : vector<8x32xf32>
    %187 = vector.extract_strided_slice %180 {offsets = [0, 32], sizes = [8, 32], strides = [1, 1]} : vector<8x128xf32> to vector<8x32xf32>
    %188 = arith.negf %187 : vector<8x32xf32>
    %189 = math.exp %188 : vector<8x32xf32>
    %cst_55 = arith.constant 1.000000e+00 : f32
    %190 = vector.broadcast %cst_55 : f32 to vector<8x32xf32>
    %191 = arith.addf %190, %189 : vector<8x32xf32>
    %192 = arith.divf %190, %191 : vector<8x32xf32>
    %193 = vector.extract_strided_slice %180 {offsets = [0, 64], sizes = [8, 32], strides = [1, 1]} : vector<8x128xf32> to vector<8x32xf32>
    %194 = vector.extract_strided_slice %180 {offsets = [0, 96], sizes = [8, 32], strides = [1, 1]} : vector<8x128xf32> to vector<8x32xf32>
    %195 = arith.mulf %186, %194 : vector<8x32xf32>
    %196 = arith.addf %193, %195 : vector<8x32xf32>
    %197 = math.tanh %196 : vector<8x32xf32>
    %cst_56 = arith.constant 1.000000e+00 : f32
    %198 = vector.broadcast %cst_56 : f32 to vector<8x32xf32>
    %199 = arith.subf %198, %192 : vector<8x32xf32>
    %200 = arith.mulf %199, %197 : vector<8x32xf32>
    %201 = arith.mulf %192, %149 : vector<8x32xf32>
    %202 = arith.addf %200, %201 : vector<8x32xf32>
    %203 = vector.extract_strided_slice %33 {offsets = [24, 0], sizes = [8, 96], strides = [1, 1]} : vector<64x96xf32> to vector<8x96xf32>
    %204 = arith.truncf %176 : vector<8x32xf32> to vector<8x32xbf16>
    %cst_57 = arith.constant dense<0.000000e+00> : vector<8x96xf32>
    %205 = tpu.matmul %204, %34, %cst_57 {dimension_numbers = #tpu.dot_dimension_numbers<[1], [0], [0], [1], [0, 0, 1, 1], [], []>} : vector<8x32xbf16>, vector<32x96xbf16>, vector<8x96xf32> -> vector<8x96xf32>
    %206 = arith.addf %205, %37 : vector<8x96xf32>
    %207 = arith.addf %203, %206 : vector<8x96xf32>
    %208 = vector.extract_strided_slice %207 {offsets = [0, 0], sizes = [8, 32], strides = [1, 1]} : vector<8x96xf32> to vector<8x32xf32>
    %209 = arith.negf %208 : vector<8x32xf32>
    %210 = math.exp %209 : vector<8x32xf32>
    %cst_58 = arith.constant 1.000000e+00 : f32
    %211 = vector.broadcast %cst_58 : f32 to vector<8x32xf32>
    %212 = arith.addf %211, %210 : vector<8x32xf32>
    %213 = arith.divf %211, %212 : vector<8x32xf32>
    %214 = vector.extract_strided_slice %207 {offsets = [0, 32], sizes = [8, 32], strides = [1, 1]} : vector<8x96xf32> to vector<8x32xf32>
    %215 = arith.negf %214 : vector<8x32xf32>
    %216 = math.exp %215 : vector<8x32xf32>
    %cst_59 = arith.constant 1.000000e+00 : f32
    %217 = vector.broadcast %cst_59 : f32 to vector<8x32xf32>
    %218 = arith.addf %217, %216 : vector<8x32xf32>
    %219 = arith.divf %217, %218 : vector<8x32xf32>
    %220 = vector.extract_strided_slice %203 {offsets = [0, 64], sizes = [8, 32], strides = [1, 1]} : vector<8x96xf32> to vector<8x32xf32>
    %221 = vector.extract_strided_slice %206 {offsets = [0, 64], sizes = [8, 32], strides = [1, 1]} : vector<8x96xf32> to vector<8x32xf32>
    %222 = arith.mulf %213, %221 : vector<8x32xf32>
    %223 = arith.addf %220, %222 : vector<8x32xf32>
    %224 = math.tanh %223 : vector<8x32xf32>
    %cst_60 = arith.constant 1.000000e+00 : f32
    %225 = vector.broadcast %cst_60 : f32 to vector<8x32xf32>
    %226 = arith.subf %225, %219 : vector<8x32xf32>
    %227 = arith.mulf %226, %224 : vector<8x32xf32>
    %228 = arith.mulf %219, %176 : vector<8x32xf32>
    %229 = arith.addf %227, %228 : vector<8x32xf32>
    %230 = tpu.concatenate %229, %202 in 1 : vector<8x32xf32>, vector<8x32xf32> -> vector<8x64xf32>
    %231 = arith.truncf %230 : vector<8x64xf32> to vector<8x64xbf16>
    %cst_61 = arith.constant dense<0.000000e+00> : vector<8x128xf32>
    %232 = tpu.matmul %231, %39, %cst_61 {dimension_numbers = #tpu.dot_dimension_numbers<[1], [0], [0], [1], [0, 0, 1, 1], [], []>} : vector<8x64xbf16>, vector<64x128xbf16>, vector<8x128xf32> -> vector<8x128xf32>
    %233 = arith.addf %232, %43 : vector<8x128xf32>
    %234 = vector.extract_strided_slice %233 {offsets = [0, 0], sizes = [8, 32], strides = [1, 1]} : vector<8x128xf32> to vector<8x32xf32>
    %235 = arith.negf %234 : vector<8x32xf32>
    %236 = math.exp %235 : vector<8x32xf32>
    %cst_62 = arith.constant 1.000000e+00 : f32
    %237 = vector.broadcast %cst_62 : f32 to vector<8x32xf32>
    %238 = arith.addf %237, %236 : vector<8x32xf32>
    %239 = arith.divf %237, %238 : vector<8x32xf32>
    %240 = vector.extract_strided_slice %233 {offsets = [0, 32], sizes = [8, 32], strides = [1, 1]} : vector<8x128xf32> to vector<8x32xf32>
    %241 = arith.negf %240 : vector<8x32xf32>
    %242 = math.exp %241 : vector<8x32xf32>
    %cst_63 = arith.constant 1.000000e+00 : f32
    %243 = vector.broadcast %cst_63 : f32 to vector<8x32xf32>
    %244 = arith.addf %243, %242 : vector<8x32xf32>
    %245 = arith.divf %243, %244 : vector<8x32xf32>
    %246 = vector.extract_strided_slice %233 {offsets = [0, 64], sizes = [8, 32], strides = [1, 1]} : vector<8x128xf32> to vector<8x32xf32>
    %247 = vector.extract_strided_slice %233 {offsets = [0, 96], sizes = [8, 32], strides = [1, 1]} : vector<8x128xf32> to vector<8x32xf32>
    %248 = arith.mulf %239, %247 : vector<8x32xf32>
    %249 = arith.addf %246, %248 : vector<8x32xf32>
    %250 = math.tanh %249 : vector<8x32xf32>
    %cst_64 = arith.constant 1.000000e+00 : f32
    %251 = vector.broadcast %cst_64 : f32 to vector<8x32xf32>
    %252 = arith.subf %251, %245 : vector<8x32xf32>
    %253 = arith.mulf %252, %250 : vector<8x32xf32>
    %254 = arith.mulf %245, %202 : vector<8x32xf32>
    %255 = arith.addf %253, %254 : vector<8x32xf32>
    %256 = vector.extract_strided_slice %33 {offsets = [32, 0], sizes = [8, 96], strides = [1, 1]} : vector<64x96xf32> to vector<8x96xf32>
    %257 = arith.truncf %229 : vector<8x32xf32> to vector<8x32xbf16>
    %cst_65 = arith.constant dense<0.000000e+00> : vector<8x96xf32>
    %258 = tpu.matmul %257, %34, %cst_65 {dimension_numbers = #tpu.dot_dimension_numbers<[1], [0], [0], [1], [0, 0, 1, 1], [], []>} : vector<8x32xbf16>, vector<32x96xbf16>, vector<8x96xf32> -> vector<8x96xf32>
    %259 = arith.addf %258, %37 : vector<8x96xf32>
    %260 = arith.addf %256, %259 : vector<8x96xf32>
    %261 = vector.extract_strided_slice %260 {offsets = [0, 0], sizes = [8, 32], strides = [1, 1]} : vector<8x96xf32> to vector<8x32xf32>
    %262 = arith.negf %261 : vector<8x32xf32>
    %263 = math.exp %262 : vector<8x32xf32>
    %cst_66 = arith.constant 1.000000e+00 : f32
    %264 = vector.broadcast %cst_66 : f32 to vector<8x32xf32>
    %265 = arith.addf %264, %263 : vector<8x32xf32>
    %266 = arith.divf %264, %265 : vector<8x32xf32>
    %267 = vector.extract_strided_slice %260 {offsets = [0, 32], sizes = [8, 32], strides = [1, 1]} : vector<8x96xf32> to vector<8x32xf32>
    %268 = arith.negf %267 : vector<8x32xf32>
    %269 = math.exp %268 : vector<8x32xf32>
    %cst_67 = arith.constant 1.000000e+00 : f32
    %270 = vector.broadcast %cst_67 : f32 to vector<8x32xf32>
    %271 = arith.addf %270, %269 : vector<8x32xf32>
    %272 = arith.divf %270, %271 : vector<8x32xf32>
    %273 = vector.extract_strided_slice %256 {offsets = [0, 64], sizes = [8, 32], strides = [1, 1]} : vector<8x96xf32> to vector<8x32xf32>
    %274 = vector.extract_strided_slice %259 {offsets = [0, 64], sizes = [8, 32], strides = [1, 1]} : vector<8x96xf32> to vector<8x32xf32>
    %275 = arith.mulf %266, %274 : vector<8x32xf32>
    %276 = arith.addf %273, %275 : vector<8x32xf32>
    %277 = math.tanh %276 : vector<8x32xf32>
    %cst_68 = arith.constant 1.000000e+00 : f32
    %278 = vector.broadcast %cst_68 : f32 to vector<8x32xf32>
    %279 = arith.subf %278, %272 : vector<8x32xf32>
    %280 = arith.mulf %279, %277 : vector<8x32xf32>
    %281 = arith.mulf %272, %229 : vector<8x32xf32>
    %282 = arith.addf %280, %281 : vector<8x32xf32>
    %283 = tpu.concatenate %282, %255 in 1 : vector<8x32xf32>, vector<8x32xf32> -> vector<8x64xf32>
    %284 = arith.truncf %283 : vector<8x64xf32> to vector<8x64xbf16>
    %cst_69 = arith.constant dense<0.000000e+00> : vector<8x128xf32>
    %285 = tpu.matmul %284, %39, %cst_69 {dimension_numbers = #tpu.dot_dimension_numbers<[1], [0], [0], [1], [0, 0, 1, 1], [], []>} : vector<8x64xbf16>, vector<64x128xbf16>, vector<8x128xf32> -> vector<8x128xf32>
    %286 = arith.addf %285, %43 : vector<8x128xf32>
    %287 = vector.extract_strided_slice %286 {offsets = [0, 0], sizes = [8, 32], strides = [1, 1]} : vector<8x128xf32> to vector<8x32xf32>
    %288 = arith.negf %287 : vector<8x32xf32>
    %289 = math.exp %288 : vector<8x32xf32>
    %cst_70 = arith.constant 1.000000e+00 : f32
    %290 = vector.broadcast %cst_70 : f32 to vector<8x32xf32>
    %291 = arith.addf %290, %289 : vector<8x32xf32>
    %292 = arith.divf %290, %291 : vector<8x32xf32>
    %293 = vector.extract_strided_slice %286 {offsets = [0, 32], sizes = [8, 32], strides = [1, 1]} : vector<8x128xf32> to vector<8x32xf32>
    %294 = arith.negf %293 : vector<8x32xf32>
    %295 = math.exp %294 : vector<8x32xf32>
    %cst_71 = arith.constant 1.000000e+00 : f32
    %296 = vector.broadcast %cst_71 : f32 to vector<8x32xf32>
    %297 = arith.addf %296, %295 : vector<8x32xf32>
    %298 = arith.divf %296, %297 : vector<8x32xf32>
    %299 = vector.extract_strided_slice %286 {offsets = [0, 64], sizes = [8, 32], strides = [1, 1]} : vector<8x128xf32> to vector<8x32xf32>
    %300 = vector.extract_strided_slice %286 {offsets = [0, 96], sizes = [8, 32], strides = [1, 1]} : vector<8x128xf32> to vector<8x32xf32>
    %301 = arith.mulf %292, %300 : vector<8x32xf32>
    %302 = arith.addf %299, %301 : vector<8x32xf32>
    %303 = math.tanh %302 : vector<8x32xf32>
    %cst_72 = arith.constant 1.000000e+00 : f32
    %304 = vector.broadcast %cst_72 : f32 to vector<8x32xf32>
    %305 = arith.subf %304, %298 : vector<8x32xf32>
    %306 = arith.mulf %305, %303 : vector<8x32xf32>
    %307 = arith.mulf %298, %255 : vector<8x32xf32>
    %308 = arith.addf %306, %307 : vector<8x32xf32>
    %309 = vector.extract_strided_slice %33 {offsets = [40, 0], sizes = [8, 96], strides = [1, 1]} : vector<64x96xf32> to vector<8x96xf32>
    %310 = arith.truncf %282 : vector<8x32xf32> to vector<8x32xbf16>
    %cst_73 = arith.constant dense<0.000000e+00> : vector<8x96xf32>
    %311 = tpu.matmul %310, %34, %cst_73 {dimension_numbers = #tpu.dot_dimension_numbers<[1], [0], [0], [1], [0, 0, 1, 1], [], []>} : vector<8x32xbf16>, vector<32x96xbf16>, vector<8x96xf32> -> vector<8x96xf32>
    %312 = arith.addf %311, %37 : vector<8x96xf32>
    %313 = arith.addf %309, %312 : vector<8x96xf32>
    %314 = vector.extract_strided_slice %313 {offsets = [0, 0], sizes = [8, 32], strides = [1, 1]} : vector<8x96xf32> to vector<8x32xf32>
    %315 = arith.negf %314 : vector<8x32xf32>
    %316 = math.exp %315 : vector<8x32xf32>
    %cst_74 = arith.constant 1.000000e+00 : f32
    %317 = vector.broadcast %cst_74 : f32 to vector<8x32xf32>
    %318 = arith.addf %317, %316 : vector<8x32xf32>
    %319 = arith.divf %317, %318 : vector<8x32xf32>
    %320 = vector.extract_strided_slice %313 {offsets = [0, 32], sizes = [8, 32], strides = [1, 1]} : vector<8x96xf32> to vector<8x32xf32>
    %321 = arith.negf %320 : vector<8x32xf32>
    %322 = math.exp %321 : vector<8x32xf32>
    %cst_75 = arith.constant 1.000000e+00 : f32
    %323 = vector.broadcast %cst_75 : f32 to vector<8x32xf32>
    %324 = arith.addf %323, %322 : vector<8x32xf32>
    %325 = arith.divf %323, %324 : vector<8x32xf32>
    %326 = vector.extract_strided_slice %309 {offsets = [0, 64], sizes = [8, 32], strides = [1, 1]} : vector<8x96xf32> to vector<8x32xf32>
    %327 = vector.extract_strided_slice %312 {offsets = [0, 64], sizes = [8, 32], strides = [1, 1]} : vector<8x96xf32> to vector<8x32xf32>
    %328 = arith.mulf %319, %327 : vector<8x32xf32>
    %329 = arith.addf %326, %328 : vector<8x32xf32>
    %330 = math.tanh %329 : vector<8x32xf32>
    %cst_76 = arith.constant 1.000000e+00 : f32
    %331 = vector.broadcast %cst_76 : f32 to vector<8x32xf32>
    %332 = arith.subf %331, %325 : vector<8x32xf32>
    %333 = arith.mulf %332, %330 : vector<8x32xf32>
    %334 = arith.mulf %325, %282 : vector<8x32xf32>
    %335 = arith.addf %333, %334 : vector<8x32xf32>
    %336 = tpu.concatenate %335, %308 in 1 : vector<8x32xf32>, vector<8x32xf32> -> vector<8x64xf32>
    %337 = arith.truncf %336 : vector<8x64xf32> to vector<8x64xbf16>
    %cst_77 = arith.constant dense<0.000000e+00> : vector<8x128xf32>
    %338 = tpu.matmul %337, %39, %cst_77 {dimension_numbers = #tpu.dot_dimension_numbers<[1], [0], [0], [1], [0, 0, 1, 1], [], []>} : vector<8x64xbf16>, vector<64x128xbf16>, vector<8x128xf32> -> vector<8x128xf32>
    %339 = arith.addf %338, %43 : vector<8x128xf32>
    %340 = vector.extract_strided_slice %339 {offsets = [0, 0], sizes = [8, 32], strides = [1, 1]} : vector<8x128xf32> to vector<8x32xf32>
    %341 = arith.negf %340 : vector<8x32xf32>
    %342 = math.exp %341 : vector<8x32xf32>
    %cst_78 = arith.constant 1.000000e+00 : f32
    %343 = vector.broadcast %cst_78 : f32 to vector<8x32xf32>
    %344 = arith.addf %343, %342 : vector<8x32xf32>
    %345 = arith.divf %343, %344 : vector<8x32xf32>
    %346 = vector.extract_strided_slice %339 {offsets = [0, 32], sizes = [8, 32], strides = [1, 1]} : vector<8x128xf32> to vector<8x32xf32>
    %347 = arith.negf %346 : vector<8x32xf32>
    %348 = math.exp %347 : vector<8x32xf32>
    %cst_79 = arith.constant 1.000000e+00 : f32
    %349 = vector.broadcast %cst_79 : f32 to vector<8x32xf32>
    %350 = arith.addf %349, %348 : vector<8x32xf32>
    %351 = arith.divf %349, %350 : vector<8x32xf32>
    %352 = vector.extract_strided_slice %339 {offsets = [0, 64], sizes = [8, 32], strides = [1, 1]} : vector<8x128xf32> to vector<8x32xf32>
    %353 = vector.extract_strided_slice %339 {offsets = [0, 96], sizes = [8, 32], strides = [1, 1]} : vector<8x128xf32> to vector<8x32xf32>
    %354 = arith.mulf %345, %353 : vector<8x32xf32>
    %355 = arith.addf %352, %354 : vector<8x32xf32>
    %356 = math.tanh %355 : vector<8x32xf32>
    %cst_80 = arith.constant 1.000000e+00 : f32
    %357 = vector.broadcast %cst_80 : f32 to vector<8x32xf32>
    %358 = arith.subf %357, %351 : vector<8x32xf32>
    %359 = arith.mulf %358, %356 : vector<8x32xf32>
    %360 = arith.mulf %351, %308 : vector<8x32xf32>
    %361 = arith.addf %359, %360 : vector<8x32xf32>
    %362 = vector.extract_strided_slice %33 {offsets = [48, 0], sizes = [8, 96], strides = [1, 1]} : vector<64x96xf32> to vector<8x96xf32>
    %363 = arith.truncf %335 : vector<8x32xf32> to vector<8x32xbf16>
    %cst_81 = arith.constant dense<0.000000e+00> : vector<8x96xf32>
    %364 = tpu.matmul %363, %34, %cst_81 {dimension_numbers = #tpu.dot_dimension_numbers<[1], [0], [0], [1], [0, 0, 1, 1], [], []>} : vector<8x32xbf16>, vector<32x96xbf16>, vector<8x96xf32> -> vector<8x96xf32>
    %365 = arith.addf %364, %37 : vector<8x96xf32>
    %366 = arith.addf %362, %365 : vector<8x96xf32>
    %367 = vector.extract_strided_slice %366 {offsets = [0, 0], sizes = [8, 32], strides = [1, 1]} : vector<8x96xf32> to vector<8x32xf32>
    %368 = arith.negf %367 : vector<8x32xf32>
    %369 = math.exp %368 : vector<8x32xf32>
    %cst_82 = arith.constant 1.000000e+00 : f32
    %370 = vector.broadcast %cst_82 : f32 to vector<8x32xf32>
    %371 = arith.addf %370, %369 : vector<8x32xf32>
    %372 = arith.divf %370, %371 : vector<8x32xf32>
    %373 = vector.extract_strided_slice %366 {offsets = [0, 32], sizes = [8, 32], strides = [1, 1]} : vector<8x96xf32> to vector<8x32xf32>
    %374 = arith.negf %373 : vector<8x32xf32>
    %375 = math.exp %374 : vector<8x32xf32>
    %cst_83 = arith.constant 1.000000e+00 : f32
    %376 = vector.broadcast %cst_83 : f32 to vector<8x32xf32>
    %377 = arith.addf %376, %375 : vector<8x32xf32>
    %378 = arith.divf %376, %377 : vector<8x32xf32>
    %379 = vector.extract_strided_slice %362 {offsets = [0, 64], sizes = [8, 32], strides = [1, 1]} : vector<8x96xf32> to vector<8x32xf32>
    %380 = vector.extract_strided_slice %365 {offsets = [0, 64], sizes = [8, 32], strides = [1, 1]} : vector<8x96xf32> to vector<8x32xf32>
    %381 = arith.mulf %372, %380 : vector<8x32xf32>
    %382 = arith.addf %379, %381 : vector<8x32xf32>
    %383 = math.tanh %382 : vector<8x32xf32>
    %cst_84 = arith.constant 1.000000e+00 : f32
    %384 = vector.broadcast %cst_84 : f32 to vector<8x32xf32>
    %385 = arith.subf %384, %378 : vector<8x32xf32>
    %386 = arith.mulf %385, %383 : vector<8x32xf32>
    %387 = arith.mulf %378, %335 : vector<8x32xf32>
    %388 = arith.addf %386, %387 : vector<8x32xf32>
    %389 = tpu.concatenate %388, %361 in 1 : vector<8x32xf32>, vector<8x32xf32> -> vector<8x64xf32>
    %390 = arith.truncf %389 : vector<8x64xf32> to vector<8x64xbf16>
    %cst_85 = arith.constant dense<0.000000e+00> : vector<8x128xf32>
    %391 = tpu.matmul %390, %39, %cst_85 {dimension_numbers = #tpu.dot_dimension_numbers<[1], [0], [0], [1], [0, 0, 1, 1], [], []>} : vector<8x64xbf16>, vector<64x128xbf16>, vector<8x128xf32> -> vector<8x128xf32>
    %392 = arith.addf %391, %43 : vector<8x128xf32>
    %393 = vector.extract_strided_slice %392 {offsets = [0, 0], sizes = [8, 32], strides = [1, 1]} : vector<8x128xf32> to vector<8x32xf32>
    %394 = arith.negf %393 : vector<8x32xf32>
    %395 = math.exp %394 : vector<8x32xf32>
    %cst_86 = arith.constant 1.000000e+00 : f32
    %396 = vector.broadcast %cst_86 : f32 to vector<8x32xf32>
    %397 = arith.addf %396, %395 : vector<8x32xf32>
    %398 = arith.divf %396, %397 : vector<8x32xf32>
    %399 = vector.extract_strided_slice %392 {offsets = [0, 32], sizes = [8, 32], strides = [1, 1]} : vector<8x128xf32> to vector<8x32xf32>
    %400 = arith.negf %399 : vector<8x32xf32>
    %401 = math.exp %400 : vector<8x32xf32>
    %cst_87 = arith.constant 1.000000e+00 : f32
    %402 = vector.broadcast %cst_87 : f32 to vector<8x32xf32>
    %403 = arith.addf %402, %401 : vector<8x32xf32>
    %404 = arith.divf %402, %403 : vector<8x32xf32>
    %405 = vector.extract_strided_slice %392 {offsets = [0, 64], sizes = [8, 32], strides = [1, 1]} : vector<8x128xf32> to vector<8x32xf32>
    %406 = vector.extract_strided_slice %392 {offsets = [0, 96], sizes = [8, 32], strides = [1, 1]} : vector<8x128xf32> to vector<8x32xf32>
    %407 = arith.mulf %398, %406 : vector<8x32xf32>
    %408 = arith.addf %405, %407 : vector<8x32xf32>
    %409 = math.tanh %408 : vector<8x32xf32>
    %cst_88 = arith.constant 1.000000e+00 : f32
    %410 = vector.broadcast %cst_88 : f32 to vector<8x32xf32>
    %411 = arith.subf %410, %404 : vector<8x32xf32>
    %412 = arith.mulf %411, %409 : vector<8x32xf32>
    %413 = arith.mulf %404, %361 : vector<8x32xf32>
    %414 = arith.addf %412, %413 : vector<8x32xf32>
    %415 = vector.extract_strided_slice %33 {offsets = [56, 0], sizes = [8, 96], strides = [1, 1]} : vector<64x96xf32> to vector<8x96xf32>
    %416 = arith.truncf %388 : vector<8x32xf32> to vector<8x32xbf16>
    %cst_89 = arith.constant dense<0.000000e+00> : vector<8x96xf32>
    %417 = tpu.matmul %416, %34, %cst_89 {dimension_numbers = #tpu.dot_dimension_numbers<[1], [0], [0], [1], [0, 0, 1, 1], [], []>} : vector<8x32xbf16>, vector<32x96xbf16>, vector<8x96xf32> -> vector<8x96xf32>
    %418 = arith.addf %417, %37 : vector<8x96xf32>
    %419 = arith.addf %415, %418 : vector<8x96xf32>
    %420 = vector.extract_strided_slice %419 {offsets = [0, 0], sizes = [8, 32], strides = [1, 1]} : vector<8x96xf32> to vector<8x32xf32>
    %421 = arith.negf %420 : vector<8x32xf32>
    %422 = math.exp %421 : vector<8x32xf32>
    %cst_90 = arith.constant 1.000000e+00 : f32
    %423 = vector.broadcast %cst_90 : f32 to vector<8x32xf32>
    %424 = arith.addf %423, %422 : vector<8x32xf32>
    %425 = arith.divf %423, %424 : vector<8x32xf32>
    %426 = vector.extract_strided_slice %419 {offsets = [0, 32], sizes = [8, 32], strides = [1, 1]} : vector<8x96xf32> to vector<8x32xf32>
    %427 = arith.negf %426 : vector<8x32xf32>
    %428 = math.exp %427 : vector<8x32xf32>
    %cst_91 = arith.constant 1.000000e+00 : f32
    %429 = vector.broadcast %cst_91 : f32 to vector<8x32xf32>
    %430 = arith.addf %429, %428 : vector<8x32xf32>
    %431 = arith.divf %429, %430 : vector<8x32xf32>
    %432 = vector.extract_strided_slice %415 {offsets = [0, 64], sizes = [8, 32], strides = [1, 1]} : vector<8x96xf32> to vector<8x32xf32>
    %433 = vector.extract_strided_slice %418 {offsets = [0, 64], sizes = [8, 32], strides = [1, 1]} : vector<8x96xf32> to vector<8x32xf32>
    %434 = arith.mulf %425, %433 : vector<8x32xf32>
    %435 = arith.addf %432, %434 : vector<8x32xf32>
    %436 = math.tanh %435 : vector<8x32xf32>
    %cst_92 = arith.constant 1.000000e+00 : f32
    %437 = vector.broadcast %cst_92 : f32 to vector<8x32xf32>
    %438 = arith.subf %437, %431 : vector<8x32xf32>
    %439 = arith.mulf %438, %436 : vector<8x32xf32>
    %440 = arith.mulf %431, %388 : vector<8x32xf32>
    %441 = arith.addf %439, %440 : vector<8x32xf32>
    %442 = tpu.concatenate %441, %414 in 1 : vector<8x32xf32>, vector<8x32xf32> -> vector<8x64xf32>
    %443 = arith.truncf %442 : vector<8x64xf32> to vector<8x64xbf16>
    %cst_93 = arith.constant dense<0.000000e+00> : vector<8x128xf32>
    %444 = tpu.matmul %443, %39, %cst_93 {dimension_numbers = #tpu.dot_dimension_numbers<[1], [0], [0], [1], [0, 0, 1, 1], [], []>} : vector<8x64xbf16>, vector<64x128xbf16>, vector<8x128xf32> -> vector<8x128xf32>
    %445 = arith.addf %444, %43 : vector<8x128xf32>
    %446 = vector.extract_strided_slice %445 {offsets = [0, 0], sizes = [8, 32], strides = [1, 1]} : vector<8x128xf32> to vector<8x32xf32>
    %447 = arith.negf %446 : vector<8x32xf32>
    %448 = math.exp %447 : vector<8x32xf32>
    %cst_94 = arith.constant 1.000000e+00 : f32
    %449 = vector.broadcast %cst_94 : f32 to vector<8x32xf32>
    %450 = arith.addf %449, %448 : vector<8x32xf32>
    %451 = arith.divf %449, %450 : vector<8x32xf32>
    %452 = vector.extract_strided_slice %445 {offsets = [0, 32], sizes = [8, 32], strides = [1, 1]} : vector<8x128xf32> to vector<8x32xf32>
    %453 = arith.negf %452 : vector<8x32xf32>
    %454 = math.exp %453 : vector<8x32xf32>
    %cst_95 = arith.constant 1.000000e+00 : f32
    %455 = vector.broadcast %cst_95 : f32 to vector<8x32xf32>
    %456 = arith.addf %455, %454 : vector<8x32xf32>
    %457 = arith.divf %455, %456 : vector<8x32xf32>
    %458 = vector.extract_strided_slice %445 {offsets = [0, 64], sizes = [8, 32], strides = [1, 1]} : vector<8x128xf32> to vector<8x32xf32>
    %459 = vector.extract_strided_slice %445 {offsets = [0, 96], sizes = [8, 32], strides = [1, 1]} : vector<8x128xf32> to vector<8x32xf32>
    %460 = arith.mulf %451, %459 : vector<8x32xf32>
    %461 = arith.addf %458, %460 : vector<8x32xf32>
    %462 = math.tanh %461 : vector<8x32xf32>
    %cst_96 = arith.constant 1.000000e+00 : f32
    %463 = vector.broadcast %cst_96 : f32 to vector<8x32xf32>
    %464 = arith.subf %463, %457 : vector<8x32xf32>
    %465 = arith.mulf %464, %462 : vector<8x32xf32>
    %466 = arith.mulf %457, %414 : vector<8x32xf32>
    %467 = arith.addf %465, %466 : vector<8x32xf32>
    %468 = tpu.concatenate %96, %149, %202, %255, %308, %361, %414, %467 in 0 : vector<8x32xf32>, vector<8x32xf32>, vector<8x32xf32>, vector<8x32xf32>, vector<8x32xf32>, vector<8x32xf32>, vector<8x32xf32>, vector<8x32xf32> -> vector<64x32xf32>
    %469 = arith.truncf %468 : vector<64x32xf32> to vector<64x32xbf16>
    %c0_97 = arith.constant 0 : index
    %c0_98 = arith.constant 0 : index
    %470 = vector.load %arg13[%c0_97, %c0_98] : memref<32x128xbf16, #tpu.memory_space<vmem>>, vector<32x128xbf16>
    %cst_99 = arith.constant dense<0.000000e+00> : vector<64x128xf32>
    %471 = tpu.matmul %469, %470, %cst_99 {dimension_numbers = #tpu.dot_dimension_numbers<[1], [0], [0], [1], [0, 0, 1, 1], [], []>} : vector<64x32xbf16>, vector<32x128xbf16>, vector<64x128xf32> -> vector<64x128xf32>
    %c0_100 = arith.constant 0 : index
    %c0_101 = arith.constant 0 : index
    %472 = vector.load %arg14[%c0_100, %c0_101] : memref<1x128xf32, #tpu.memory_space<vmem>>, vector<1x128xf32>
    %473 = vector.broadcast %472 : vector<1x128xf32> to vector<64x128xf32>
    %474 = arith.addf %471, %473 : vector<64x128xf32>
    %c0_102 = arith.constant 0 : index
    %c0_103 = arith.constant 0 : index
    %475 = vector.load %arg15[%c0_102, %c0_103] : memref<64x128xf32, #tpu.memory_space<vmem>>, vector<64x128xf32>
    tpu.vector_store %arg15[%c0_102, %c0_103], %474 {strides = array<i32>} : memref<64x128xf32, #tpu.memory_space<vmem>>, vector<64x128xf32>,
    return
  }
}

</mosaic_0001>

<llo_original>
// kernel: forward.1
$region0: #{forward.1}
  #allocation0 [shape = 'u32[]', space=smem, size = 0x4, offset = 0x4, fixed_abs, tag = 'smem constant byte address 0x4 - core index']
  #allocation1 [shape = 'u32[144,128]{1,0:T(1,128)}', space=vmem, size = 0x12000, scoped, tag = 'internal scratch']
  %s0 = inlined_call_operand.vmem [shape: f32[64,15], index: 0, kind: input, shape index: {}]
  %s1 = inlined_call_operand.vmem [shape: bf16[15,32], index: 1, kind: input, shape index: {}]
  %s2 = inlined_call_operand.vmem [shape: f32[1,32], index: 2, kind: input, shape index: {}]
  %s3 = inlined_call_operand.vmem [shape: bf16[32,32], index: 3, kind: input, shape index: {}]
  %s4 = inlined_call_operand.vmem [shape: f32[1,32], index: 4, kind: input, shape index: {}]
  %s5 = inlined_call_operand.vmem [shape: bf16[32,64], index: 5, kind: input, shape index: {}]
  %s6 = inlined_call_operand.vmem [shape: f32[1,64], index: 6, kind: input, shape index: {}]
  %s7 = inlined_call_operand.vmem [shape: bf16[32,96], index: 7, kind: input, shape index: {}]
  %s8 = inlined_call_operand.vmem [shape: f32[1,96], index: 8, kind: input, shape index: {}]
  %s9 = inlined_call_operand.vmem [shape: bf16[32,96], index: 9, kind: input, shape index: {}]
  %s10 = inlined_call_operand.vmem [shape: f32[1,96], index: 10, kind: input, shape index: {}]
  %s11 = inlined_call_operand.vmem [shape: bf16[1,64,128], index: 11, kind: input, shape index: {}]
  %s12 = inlined_call_operand.vmem [shape: f32[1,1,128], index: 12, kind: input, shape index: {}]
  %s13 = inlined_call_operand.vmem [shape: bf16[32,128], index: 13, kind: input, shape index: {}]
  %s14 = inlined_call_operand.vmem [shape: f32[1,128], index: 14, kind: input, shape index: {}]
  %s15 = inlined_call_operand.vmem [shape: f32[64,128], index: 15, kind: output, shape index: {}]
  %s16 = sld [smem:[#allocation0]]
  $region70: #{forward.1} parent=0
    _
  %s18 = ssub.s32 1, %s16
  %s19 = scalar_select 0, %s18, %s16
  // Predicated region
  $region2: #{forward.1} parent=0 // pred_check
    _
  $region3: #{forward.1} parent=0 // pred_check_branch
    %21 = sbr.rel (0) target = $region5
  $region4: #{forward.1} parent=0 // pred_region
    _
  $region5: #{forward.1} parent=0 // pred_fallthru
    _
  // Predicated region
  $region6: #{forward.1} parent=0 // pred_check
    _
  $region7: #{forward.1} parent=0 // pred_check_branch
    %23 = sbr.rel (0) target = $region9
  $region8: #{forward.1} parent=0 // pred_region
    _
  $region9: #{forward.1} parent=0 // pred_fallthru
    _
  // Predicated region
  $region10: #{forward.1} parent=0 // pred_check
    _
  $region11: #{forward.1} parent=0 // pred_check_branch
    %25 = sbr.rel (0) target = $region13
  $region12: #{forward.1} parent=0 // pred_region
    _
  $region13: #{forward.1} parent=0 // pred_fallthru
    _
  // Predicated region
  $region14: #{forward.1} parent=0 // pred_check
    _
  $region15: #{forward.1} parent=0 // pred_check_branch
    %27 = sbr.rel (0) target = $region17
  $region16: #{forward.1} parent=0 // pred_region
    _
  $region17: #{forward.1} parent=0 // pred_fallthru
    _
  // Predicated region
  $region18: #{forward.1} parent=0 // pred_check
    _
  $region19: #{forward.1} parent=0 // pred_check_branch
    %29 = sbr.rel (0) target = $region21
  $region20: #{forward.1} parent=0 // pred_region
    _
  $region21: #{forward.1} parent=0 // pred_fallthru
    _
  // Predicated region
  $region22: #{forward.1} parent=0 // pred_check
    _
  $region23: #{forward.1} parent=0 // pred_check_branch
    %31 = sbr.rel (0) target = $region25
  $region24: #{forward.1} parent=0 // pred_region
    _
  $region25: #{forward.1} parent=0 // pred_fallthru
    _
  // Predicated region
  $region26: #{forward.1} parent=0 // pred_check
    _
  $region27: #{forward.1} parent=0 // pred_check_branch
    %33 = sbr.rel (0) target = $region29
  $region28: #{forward.1} parent=0 // pred_region
    _
  $region29: #{forward.1} parent=0 // pred_fallthru
    _
  // Predicated region
  $region30: #{forward.1} parent=0 // pred_check
    _
  $region31: #{forward.1} parent=0 // pred_check_branch
    %35 = sbr.rel (0) target = $region33
  $region32: #{forward.1} parent=0 // pred_region
    _
  $region33: #{forward.1} parent=0 // pred_fallthru
    _
  // Predicated region
  $region34: #{forward.1} parent=0 // pred_check
    _
  $region35: #{forward.1} parent=0 // pred_check_branch
    %37 = sbr.rel (0) target = $region37
  $region36: #{forward.1} parent=0 // pred_region
    _
  $region37: #{forward.1} parent=0 // pred_fallthru
    _
  // Predicated region
  $region38: #{forward.1} parent=0 // pred_check
    _
  $region39: #{forward.1} parent=0 // pred_check_branch
    %39 = sbr.rel (0) target = $region41
  $region40: #{forward.1} parent=0 // pred_region
    _
  $region41: #{forward.1} parent=0 // pred_fallthru
    _
  // Predicated region
  $region42: #{forward.1} parent=0 // pred_check
    _
  $region43: #{forward.1} parent=0 // pred_check_branch
    %41 = sbr.rel (0) target = $region45
  $region44: #{forward.1} parent=0 // pred_region
    _
  $region45: #{forward.1} parent=0 // pred_fallthru
    _
  // Predicated region
  $region46: #{forward.1} parent=0 // pred_check
    _
  $region47: #{forward.1} parent=0 // pred_check_branch
    %43 = sbr.rel (0) target = $region49
  $region48: #{forward.1} parent=0 // pred_region
    _
  $region49: #{forward.1} parent=0 // pred_fallthru
    _
  // Predicated region
  $region50: #{forward.1} parent=0 // pred_check
    _
  $region51: #{forward.1} parent=0 // pred_check_branch
    %45 = sbr.rel (0) target = $region53
  $region52: #{forward.1} parent=0 // pred_region
    _
  $region53: #{forward.1} parent=0 // pred_fallthru
    _
  // Predicated region
  $region54: #{forward.1} parent=0 // pred_check
    _
  $region55: #{forward.1} parent=0 // pred_check_branch
    %47 = sbr.rel (0) target = $region57
  $region56: #{forward.1} parent=0 // pred_region
    _
  $region57: #{forward.1} parent=0 // pred_fallthru
    _
  // Predicated region
  $region58: #{forward.1} parent=0 // pred_check
    _
  $region59: #{forward.1} parent=0 // pred_check_branch
    %49 = sbr.rel (0) target = $region61
  $region60: #{forward.1} parent=0 // pred_region
    _
  $region61: #{forward.1} parent=0 // pred_fallthru
    _
  %v51 = vld [vmem:[%s0] sm:$0xff]
  %v52 = vld [vmem:[%s0 + $0x8] sm:$0xff]
  %v53 = vld [vmem:[%s0 + $0x10] sm:$0xff]
  %v54 = vld [vmem:[%s0 + $0x18] sm:$0xff]
  %v55 = vld [vmem:[%s0 + $0x20] sm:$0xff]
  %v56 = vld [vmem:[%s0 + $0x28] sm:$0xff]
  %v57 = vld [vmem:[%s0 + $0x30] sm:$0xff]
  %v58 = vld [vmem:[%s0 + $0x38] sm:$0xff]
  %v59 = vpack.c.bf16 %v52, %v51
  %v60 = vpack.c.bf16 %v54, %v53
  %v61 = vpack.c.bf16 %v56, %v55
  %v62 = vpack.c.bf16 %v58, %v57
  %v63 = vld [vmem:[%s1] sm:$0xf]
  %v64 = vld [vmem:[%s1 + $0x4] sm:$0xf]
  %v65 = vld [vmem:[%s2] sm:$0x1]
  %v67 = vlaneseq
  %v68 = vshrl.u32 %v67, 7
  %v69 = vsub.s32 0, %v68
  %v70 = vrot.slane %v65, %v69
  %v74 = vunpack.c.l.b16 %v63
  %v75 = vunpack.c.l.b16 %v64
  %v76 = vpack.c.b16 %v75, %v74
  %vm77 = vcmask 121856
  %v79 = vsel %vm77, %v59, 0
  %v82 = vsel %vm77, %v60, 0
  %v85 = vsel %vm77, %v61, 0
  %v88 = vsel %vm77, %v62, 0
  %vm90 = vcmask 1046528
  %vm91 = vcmask 1047552
  %v92 = vsel %vm90, 4294967295, 65535
  %v93 = vsel %vm91, %v92, 0
  %v95 = vand.u32 %v76, %v93
  %97 = vmatprep.subr.bf16.mxu0 0
  %98 = vmatpush1.bf16.msra.mxu0 0
  %99 = vmatprep.subr.bf16.mxu0 0
  %100 = vmatpush1.bf16.msra.mxu0 0
  %101 = vmatprep.subr.bf16.mxu0 0
  %102 = vmatpush1.bf16.msra.mxu0 0
  %103 = vmatprep.subr.bf16.mxu0 0
  %104 = vmatpush1.bf16.msra.mxu0 0
  %105 = vmatprep.subr.bf16.mxu0 0
  %106 = vmatpush1.bf16.msra.mxu0 0
  %107 = vmatprep.subr.bf16.mxu0 0
  %108 = vmatpush1.bf16.msra.mxu0 0
  %109 = vmatprep.subr.bf16.mxu0 0
  %110 = vmatpush1.bf16.msra.mxu0 0
  %111 = vmatprep.subr.bf16.mxu0 0
  %112 = vmatpush1.bf16.msra.mxu0 %v95
  %113 = vmatprep.subr.bf16.mxu0 0
  %114 = vmatpush2.bf16.msra.mxu0 0
  %115 = vmatprep.subr.bf16.mxu0 0
  %116 = vmatpush2.bf16.msra.mxu0 0
  %117 = vmatprep.subr.bf16.mxu0 0
  %118 = vmatpush2.bf16.msra.mxu0 0
  %119 = vmatprep.subr.bf16.mxu0 0
  %120 = vmatpush2.bf16.msra.mxu0 0
  %121 = vmatprep.subr.bf16.mxu0 0
  %122 = vmatpush2.bf16.msra.mxu0 0
  %123 = vmatprep.subr.bf16.mxu0 0
  %124 = vmatpush2.bf16.msra.mxu0 0
  %125 = vmatprep.subr.bf16.mxu0 0
  %126 = vmatpush2.bf16.msra.mxu0 0
  %127 = vmatprep.subr.bf16.mxu0 0
  %128 = vmatpush2.bf16.msra.mxu0 0
  %129 = vmatprep.mubr.bf16.mxu0 0
  %130 = vmatmul.mubr.bf16.gmra.mxu0 %v79
  %v131 = vpop.f32.mrf.mxu0
  %v132 = vadd.f32 %v70, %v131
  %v133 = vpop.f32.mrf.mxu0
  %v134 = vpop.f32.mrf.mxu0
  %v135 = vadd.f32 %v70, %v134
  %v136 = vpop.f32.mrf.mxu0
  %137 = vmatprep.mubr.bf16.mxu0 0
  %138 = vmatmul.mubr.bf16.gmra.mxu0 %v82
  %v139 = vpop.f32.mrf.mxu0
  %v140 = vadd.f32 %v70, %v139
  %v141 = vpop.f32.mrf.mxu0
  %v142 = vpop.f32.mrf.mxu0
  %v143 = vadd.f32 %v70, %v142
  %v144 = vpop.f32.mrf.mxu0
  %145 = vmatprep.mubr.bf16.mxu0 0
  %146 = vmatmul.mubr.bf16.gmra.mxu0 %v85
  %v147 = vpop.f32.mrf.mxu0
  %v148 = vadd.f32 %v70, %v147
  %v149 = vpop.f32.mrf.mxu0
  %v150 = vpop.f32.mrf.mxu0
  %v151 = vadd.f32 %v70, %v150
  %v152 = vpop.f32.mrf.mxu0
  %153 = vmatprep.mubr.bf16.mxu0 0
  %154 = vmatmul.mubr.bf16.gmra.mxu0 %v88
  %v155 = vpop.f32.mrf.mxu0
  %v156 = vadd.f32 %v70, %v155
  %v157 = vpop.f32.mrf.mxu0
  %v158 = vpop.f32.mrf.mxu0
  %v159 = vadd.f32 %v70, %v158
  %v160 = vpop.f32.mrf.mxu0
  %161 = vdwg.mxu0
  %v162 = vmax.f32 %v132, 0.0
  %v163 = vmax.f32 %v135, 0.0
  %v164 = vmax.f32 %v140, 0.0
  %v165 = vmax.f32 %v143, 0.0
  %v166 = vmax.f32 %v148, 0.0
  %v167 = vmax.f32 %v151, 0.0
  %v168 = vmax.f32 %v156, 0.0
  %v169 = vmax.f32 %v159, 0.0
  %v170 = vpack.c.bf16 %v163, %v162
  %v171 = vpack.c.bf16 %v165, %v164
  %v172 = vpack.c.bf16 %v167, %v166
  %v173 = vpack.c.bf16 %v169, %v168
  %v174 = vld [vmem:[%s3] sm:$0xf]
  %v175 = vld [vmem:[%s3 + $0x4] sm:$0xf]
  %v176 = vld [vmem:[%s3 + $0x8] sm:$0xf]
  %v177 = vld [vmem:[%s3 + $0xc] sm:$0xf]
  %v178 = vld [vmem:[%s4] sm:$0x1]
  %v180 = vlaneseq
  %v181 = vshrl.u32 %v180, 7
  %v182 = vsub.s32 0, %v181
  %v183 = vrot.slane %v178, %v182
  %v189 = vunpack.c.l.b16 %v174
  %v190 = vunpack.c.l.b16 %v175
  %v191 = vunpack.c.l.b16 %v176
  %v192 = vunpack.c.l.b16 %v177
  %v193 = vpack.c.b16 %v190, %v189
  %v194 = vpack.c.b16 %v192, %v191
  %vm197 = vcmask 261120
  %v199 = vsel %vm197, %v170, 0
  %v202 = vsel %vm197, %v171, 0
  %v205 = vsel %vm197, %v172, 0
  %v208 = vsel %vm197, %v173, 0
  %210 = vmatprep.subr.bf16.mxu0 0
  %211 = vmatpush1.bf16.msra.mxu0 0
  %212 = vmatprep.subr.bf16.mxu0 0
  %213 = vmatpush1.bf16.msra.mxu0 0
  %214 = vmatprep.subr.bf16.mxu0 0
  %215 = vmatpush1.bf16.msra.mxu0 0
  %216 = vmatprep.subr.bf16.mxu0 0
  %217 = vmatpush1.bf16.msra.mxu0 0
  %218 = vmatprep.subr.bf16.mxu0 0
  %219 = vmatpush1.bf16.msra.mxu0 0
  %220 = vmatprep.subr.bf16.mxu0 0
  %221 = vmatpush1.bf16.msra.mxu0 0
  %222 = vmatprep.subr.bf16.mxu0 0
  %223 = vmatpush1.bf16.msra.mxu0 %v194
  %224 = vmatprep.subr.bf16.mxu0 0
  %225 = vmatpush1.bf16.msra.mxu0 %v193
  %226 = vmatprep.subr.bf16.mxu0 0
  %227 = vmatpush2.bf16.msra.mxu0 0
  %228 = vmatprep.subr.bf16.mxu0 0
  %229 = vmatpush2.bf16.msra.mxu0 0
  %230 = vmatprep.subr.bf16.mxu0 0
  %231 = vmatpush2.bf16.msra.mxu0 0
  %232 = vmatprep.subr.bf16.mxu0 0
  %233 = vmatpush2.bf16.msra.mxu0 0
  %234 = vmatprep.subr.bf16.mxu0 0
  %235 = vmatpush2.bf16.msra.mxu0 0
  %236 = vmatprep.subr.bf16.mxu0 0
  %237 = vmatpush2.bf16.msra.mxu0 0
  %238 = vmatprep.subr.bf16.mxu0 0
  %239 = vmatpush2.bf16.msra.mxu0 0
  %240 = vmatprep.subr.bf16.mxu0 0
  %241 = vmatpush2.bf16.msra.mxu0 0
  %242 = vmatprep.mubr.bf16.mxu0 0
  %243 = vmatmul.mubr.bf16.gmra.mxu0 %v199
  %v244 = vpop.f32.mrf.mxu0
  %v245 = vadd.f32 %v183, %v244
  %v246 = vpop.f32.mrf.mxu0
  %v247 = vpop.f32.mrf.mxu0
  %v248 = vadd.f32 %v183, %v247
  %v249 = vpop.f32.mrf.mxu0
  %250 = vmatprep.mubr.bf16.mxu0 0
  %251 = vmatmul.mubr.bf16.gmra.mxu0 %v202
  %v252 = vpop.f32.mrf.mxu0
  %v253 = vadd.f32 %v183, %v252
  %v254 = vpop.f32.mrf.mxu0
  %v255 = vpop.f32.mrf.mxu0
  %v256 = vadd.f32 %v183, %v255
  %v257 = vpop.f32.mrf.mxu0
  %258 = vmatprep.mubr.bf16.mxu0 0
  %259 = vmatmul.mubr.bf16.gmra.mxu0 %v205
  %v260 = vpop.f32.mrf.mxu0
  %v261 = vadd.f32 %v183, %v260
  %v262 = vpop.f32.mrf.mxu0
  %v263 = vpop.f32.mrf.mxu0
  %v264 = vadd.f32 %v183, %v263
  %v265 = vpop.f32.mrf.mxu0
  %266 = vmatprep.mubr.bf16.mxu0 0
  %267 = vmatmul.mubr.bf16.gmra.mxu0 %v208
  %v268 = vpop.f32.mrf.mxu0
  %v269 = vadd.f32 %v183, %v268
  %v270 = vpop.f32.mrf.mxu0
  %v271 = vpop.f32.mrf.mxu0
  %v272 = vadd.f32 %v183, %v271
  %v273 = vpop.f32.mrf.mxu0
  %274 = vdwg.mxu0
  %v275 = vmax.f32 %v245, 0.0
  %v276 = vmax.f32 %v248, 0.0
  %v277 = vmax.f32 %v253, 0.0
  %v278 = vmax.f32 %v256, 0.0
  %v279 = vmax.f32 %v261, 0.0
  %v280 = vmax.f32 %v264, 0.0
  %v281 = vmax.f32 %v269, 0.0
  %v282 = vmax.f32 %v272, 0.0
  %v283 = vpack.c.bf16 %v275, %v275
  %v284 = vld [vmem:[%s5] sm:$0xf]
  %v285 = vld [vmem:[%s5 + $0x4] sm:$0xf]
  %v286 = vld [vmem:[%s5 + $0x8] sm:$0xf]
  %v287 = vld [vmem:[%s5 + $0xc] sm:$0xf]
  %v288 = vld [vmem:[%s6] sm:$0x1]
  %v290 = vlaneseq
  %v291 = vshrl.u32 %v290, 7
  %v292 = vsub.s32 0, %v291
  %v293 = vrot.slane %v288, %v292
  %v299 = vunpack.c.l.b16 %v284
  %v300 = vunpack.c.l.b16 %v285
  %v301 = vunpack.c.l.b16 %v286
  %v302 = vunpack.c.l.b16 %v287
  %v303 = vpack.c.b16 %v300, %v299
  %v304 = vpack.c.b16 %v302, %v301
  %v308 = vsel %vm197, %v283, 0
  %310 = vmatprep.subr.bf16.mxu0 0
  %311 = vmatpush1.bf16.msra.mxu0 0
  %312 = vmatprep.subr.bf16.mxu0 0
  %313 = vmatpush1.bf16.msra.mxu0 0
  %314 = vmatprep.subr.bf16.mxu0 0
  %315 = vmatpush1.bf16.msra.mxu0 0
  %316 = vmatprep.subr.bf16.mxu0 0
  %317 = vmatpush1.bf16.msra.mxu0 0
  %318 = vmatprep.subr.bf16.mxu0 0
  %319 = vmatpush1.bf16.msra.mxu0 0
  %320 = vmatprep.subr.bf16.mxu0 0
  %321 = vmatpush1.bf16.msra.mxu0 0
  %322 = vmatprep.subr.bf16.mxu0 0
  %323 = vmatpush1.bf16.msra.mxu0 %v304
  %324 = vmatprep.subr.bf16.mxu0 0
  %325 = vmatpush1.bf16.msra.mxu0 %v303
  %326 = vmatprep.subr.bf16.mxu0 0
  %327 = vmatpush2.bf16.msra.mxu0 0
  %328 = vmatprep.subr.bf16.mxu0 0
  %329 = vmatpush2.bf16.msra.mxu0 0
  %330 = vmatprep.subr.bf16.mxu0 0
  %331 = vmatpush2.bf16.msra.mxu0 0
  %332 = vmatprep.subr.bf16.mxu0 0
  %333 = vmatpush2.bf16.msra.mxu0 0
  %334 = vmatprep.subr.bf16.mxu0 0
  %335 = vmatpush2.bf16.msra.mxu0 0
  %336 = vmatprep.subr.bf16.mxu0 0
  %337 = vmatpush2.bf16.msra.mxu0 0
  %338 = vmatprep.subr.bf16.mxu0 0
  %339 = vmatpush2.bf16.msra.mxu0 0
  %340 = vmatprep.subr.bf16.mxu0 0
  %341 = vmatpush2.bf16.msra.mxu0 0
  %342 = vmatprep.mubr.bf16.mxu0 0
  %343 = vmatmul.mubr.bf16.gmra.mxu0 %v308
  %v344 = vpop.f32.mrf.mxu0
  %v345 = vadd.f32 %v293, %v344
  %v346 = vpop.f32.mrf.mxu0
  %v347 = vpop.f32.mrf.mxu0
  %v348 = vpop.f32.mrf.mxu0
  %349 = vdwg.mxu0
  %v350 = vmax.f32 %v345, 0.0
  %v351 = vpack.c.bf16 %v276, %v275
  %v352 = vpack.c.bf16 %v278, %v277
  %v353 = vpack.c.bf16 %v280, %v279
  %v354 = vpack.c.bf16 %v282, %v281
  %v355 = vld [vmem:[%s7] sm:$0xf]
  %v356 = vld [vmem:[%s7 + $0x4] sm:$0xf]
  %v357 = vld [vmem:[%s7 + $0x8] sm:$0xf]
  %v358 = vld [vmem:[%s7 + $0xc] sm:$0xf]
  %v359 = vld [vmem:[%s8] sm:$0x1]
  %v361 = vlaneseq
  %v362 = vshrl.u32 %v361, 7
  %v363 = vsub.s32 0, %v362
  %v364 = vrot.slane %v359, %v363
  %v370 = vunpack.c.l.b16 %v355
  %v371 = vunpack.c.l.b16 %v356
  %v372 = vunpack.c.l.b16 %v357
  %v373 = vunpack.c.l.b16 %v358
  %v374 = vpack.c.b16 %v371, %v370
  %v375 = vpack.c.b16 %v373, %v372
  %v379 = vsel %vm197, %v351, 0
  %v382 = vsel %vm197, %v352, 0
  %v385 = vsel %vm197, %v353, 0
  %v388 = vsel %vm197, %v354, 0
  %390 = vmatprep.subr.bf16.mxu0 0
  %391 = vmatpush1.bf16.msra.mxu0 0
  %392 = vmatprep.subr.bf16.mxu0 0
  %393 = vmatpush1.bf16.msra.mxu0 0
  %394 = vmatprep.subr.bf16.mxu0 0
  %395 = vmatpush1.bf16.msra.mxu0 0
  %396 = vmatprep.subr.bf16.mxu0 0
  %397 = vmatpush1.bf16.msra.mxu0 0
  %398 = vmatprep.subr.bf16.mxu0 0
  %399 = vmatpush1.bf16.msra.mxu0 0
  %400 = vmatprep.subr.bf16.mxu0 0
  %401 = vmatpush1.bf16.msra.mxu0 0
  %402 = vmatprep.subr.bf16.mxu0 0
  %403 = vmatpush1.bf16.msra.mxu0 %v375
  %404 = vmatprep.subr.bf16.mxu0 0
  %405 = vmatpush1.bf16.msra.mxu0 %v374
  %406 = vmatprep.subr.bf16.mxu0 0
  %407 = vmatpush2.bf16.msra.mxu0 0
  %408 = vmatprep.subr.bf16.mxu0 0
  %409 = vmatpush2.bf16.msra.mxu0 0
  %410 = vmatprep.subr.bf16.mxu0 0
  %411 = vmatpush2.bf16.msra.mxu0 0
  %412 = vmatprep.subr.bf16.mxu0 0
  %413 = vmatpush2.bf16.msra.mxu0 0
  %414 = vmatprep.subr.bf16.mxu0 0
  %415 = vmatpush2.bf16.msra.mxu0 0
  %416 = vmatprep.subr.bf16.mxu0 0
  %417 = vmatpush2.bf16.msra.mxu0 0
  %418 = vmatprep.subr.bf16.mxu0 0
  %419 = vmatpush2.bf16.msra.mxu0 0
  %420 = vmatprep.subr.bf16.mxu0 0
  %421 = vmatpush2.bf16.msra.mxu0 0
  %422 = vmatprep.mubr.bf16.mxu0 0
  %423 = vmatmul.mubr.bf16.gmra.mxu0 %v379
  %v424 = vpop.f32.mrf.mxu0
  %v425 = vadd.f32 %v364, %v424
  %v426 = vpop.f32.mrf.mxu0
  %v427 = vpop.f32.mrf.mxu0
  %v428 = vadd.f32 %v364, %v427
  %v429 = vpop.f32.mrf.mxu0
  %430 = vmatprep.mubr.bf16.mxu0 0
  %431 = vmatmul.mubr.bf16.gmra.mxu0 %v382
  %v432 = vpop.f32.mrf.mxu0
  %v433 = vadd.f32 %v364, %v432
  %v434 = vpop.f32.mrf.mxu0
  %v435 = vpop.f32.mrf.mxu0
  %v436 = vadd.f32 %v364, %v435
  %v437 = vpop.f32.mrf.mxu0
  %438 = vmatprep.mubr.bf16.mxu0 0
  %439 = vmatmul.mubr.bf16.gmra.mxu0 %v385
  %v440 = vpop.f32.mrf.mxu0
  %v441 = vadd.f32 %v364, %v440
  %v442 = vpop.f32.mrf.mxu0
  %v443 = vpop.f32.mrf.mxu0
  %v444 = vadd.f32 %v364, %v443
  %v445 = vpop.f32.mrf.mxu0
  %446 = vmatprep.mubr.bf16.mxu0 0
  %447 = vmatmul.mubr.bf16.gmra.mxu0 %v388
  %v448 = vpop.f32.mrf.mxu0
  %v449 = vadd.f32 %v364, %v448
  %v450 = vpop.f32.mrf.mxu0
  %v451 = vpop.f32.mrf.mxu0
  %v452 = vadd.f32 %v364, %v451
  %v453 = vpop.f32.mrf.mxu0
  %454 = vdwg.mxu0
  %v455 = vld [vmem:[%s9] sm:$0xf]
  %v456 = vld [vmem:[%s9 + $0x4] sm:$0xf]
  %v457 = vld [vmem:[%s9 + $0x8] sm:$0xf]
  %v458 = vld [vmem:[%s9 + $0xc] sm:$0xf]
  %v459 = vld [vmem:[%s10] sm:$0x1]
  %v461 = vlaneseq
  %v462 = vshrl.u32 %v461, 7
  %v463 = vsub.s32 0, %v462
  %v464 = vrot.slane %v459, %v463
  %v466 = vld [vmem:[%s11] sm:$0xf]
  %v467 = vld [vmem:[%s11 + $0x4] sm:$0xf]
  %v468 = vld [vmem:[%s11 + $0x8] sm:$0xf]
  %v469 = vld [vmem:[%s11 + $0xc] sm:$0xf]
  %v470 = vld [vmem:[%s11 + $0x10] sm:$0xf]
  %v471 = vld [vmem:[%s11 + $0x14] sm:$0xf]
  %v472 = vld [vmem:[%s11 + $0x18] sm:$0xf]
  %v473 = vld [vmem:[%s11 + $0x1c] sm:$0xf]
  %v474 = vld [vmem:[%s12] sm:$0x1]
  %v476 = vlaneseq
  %v477 = vshrl.u32 %v476, 7
  %v478 = vsub.s32 0, %v477
  %v479 = vrot.slane %v474, %v478
  %v481 = vpack.c.bf16 %v350, %v350
  %v486 = vunpack.c.l.b16 %v455
  %v487 = vunpack.c.l.b16 %v456
  %v488 = vunpack.c.l.b16 %v457
  %v489 = vunpack.c.l.b16 %v458
  %v490 = vpack.c.b16 %v487, %v486
  %v491 = vpack.c.b16 %v489, %v488
  %v495 = vsel %vm197, %v481, 0
  %497 = vmatprep.subr.bf16.mxu0 0
  %498 = vmatpush1.bf16.msra.mxu0 0
  %499 = vmatprep.subr.bf16.mxu0 0
  %500 = vmatpush1.bf16.msra.mxu0 0
  %501 = vmatprep.subr.bf16.mxu0 0
  %502 = vmatpush1.bf16.msra.mxu0 0
  %503 = vmatprep.subr.bf16.mxu0 0
  %504 = vmatpush1.bf16.msra.mxu0 0
  %505 = vmatprep.subr.bf16.mxu0 0
  %506 = vmatpush1.bf16.msra.mxu0 0
  %507 = vmatprep.subr.bf16.mxu0 0
  %508 = vmatpush1.bf16.msra.mxu0 0
  %509 = vmatprep.subr.bf16.mxu0 0
  %510 = vmatpush1.bf16.msra.mxu0 %v491
  %511 = vmatprep.subr.bf16.mxu0 0
  %512 = vmatpush1.bf16.msra.mxu0 %v490
  %513 = vmatprep.subr.bf16.mxu0 0
  %514 = vmatpush2.bf16.msra.mxu0 0
  %515 = vmatprep.subr.bf16.mxu0 0
  %516 = vmatpush2.bf16.msra.mxu0 0
  %517 = vmatprep.subr.bf16.mxu0 0
  %518 = vmatpush2.bf16.msra.mxu0 0
  %519 = vmatprep.subr.bf16.mxu0 0
  %520 = vmatpush2.bf16.msra.mxu0 0
  %521 = vmatprep.subr.bf16.mxu0 0
  %522 = vmatpush2.bf16.msra.mxu0 0
  %523 = vmatprep.subr.bf16.mxu0 0
  %524 = vmatpush2.bf16.msra.mxu0 0
  %525 = vmatprep.subr.bf16.mxu0 0
  %526 = vmatpush2.bf16.msra.mxu0 0
  %527 = vmatprep.subr.bf16.mxu0 0
  %528 = vmatpush2.bf16.msra.mxu0 0
  %529 = vmatprep.mubr.bf16.mxu0 0
  %530 = vmatmul.mubr.bf16.gmra.mxu0 %v495
  %v531 = vpop.f32.mrf.mxu0
  %v532 = vadd.f32 %v464, %v531
  %v533 = vpop.f32.mrf.mxu0
  %v534 = vpop.f32.mrf.mxu0
  %v535 = vpop.f32.mrf.mxu0
  %536 = vdwg.mxu0
  %v537 = vadd.f32 %v425, %v532
  %v538 = vxor.u32 %v537, 2147483648
  %v539 = vmul.f32 %v538, 1.442695
  %v540 = vpow.pop %v539
  %v541 = vadd.f32 %v540, 1.0
  %v542 = vrcp.pop %v541
  %v543 = vmul.f32 1.0, %v542
  %545 = vrot.lane.b32.xlu0 %v532, 64
  %v546 = vpop.permute.xlu0 %545
  %v548 = vmul.f32 %v543, %v546
  %550 = vrot.lane.b32.xlu0 %v548, 64
  %v551 = vpop.permute.xlu0 %550
  %v553 = vadd.f32 %v425, %v551
  %v554 = vtanh.pop %v553
  %v555 = vsub.f32 1.0, %v543
  %557 = vrot.lane.b32.xlu0 %v554, 96
  %v558 = vpop.permute.xlu0 %557
  %v560 = vmul.f32 %v555, %v558
  %562 = vrot.lane.b32.xlu0 %v350, 32
  %v563 = vpop.permute.xlu0 %562
  %v565 = vmul.f32 %v543, %v563
  %v566 = vadd.f32 %v560, %v565
  %568 = vrot.lane.b32.xlu0 %v566, 96
  %v569 = vpop.permute.xlu0 %568
  %v571 = vsel %vm197, %v569, %v350
  %v572 = vpack.c.bf16 %v571, %v571
  %v581 = vunpack.c.l.b16 %v466
  %v582 = vunpack.c.l.b16 %v467
  %v583 = vunpack.c.l.b16 %v468
  %v584 = vunpack.c.l.b16 %v469
  %v585 = vunpack.c.l.b16 %v470
  %v586 = vunpack.c.l.b16 %v471
  %v587 = vunpack.c.l.b16 %v472
  %v588 = vunpack.c.l.b16 %v473
  %v589 = vpack.c.b16 %v582, %v581
  %v590 = vpack.c.b16 %v584, %v583
  %v591 = vpack.c.b16 %v586, %v585
  %v592 = vpack.c.b16 %v588, %v587
  %vm597 = vcmask 523264
  %v599 = vsel %vm597, %v572, 0
  %601 = vmatprep.subr.bf16.mxu0 0
  %602 = vmatpush1.bf16.msra.mxu0 0
  %603 = vmatprep.subr.bf16.mxu0 0
  %604 = vmatpush1.bf16.msra.mxu0 0
  %605 = vmatprep.subr.bf16.mxu0 0
  %606 = vmatpush1.bf16.msra.mxu0 0
  %607 = vmatprep.subr.bf16.mxu0 0
  %608 = vmatpush1.bf16.msra.mxu0 0
  %609 = vmatprep.subr.bf16.mxu0 0
  %610 = vmatpush1.bf16.msra.mxu0 %v592
  %611 = vmatprep.subr.bf16.mxu0 0
  %612 = vmatpush1.bf16.msra.mxu0 %v591
  %613 = vmatprep.subr.bf16.mxu0 0
  %614 = vmatpush1.bf16.msra.mxu0 %v590
  %615 = vmatprep.subr.bf16.mxu0 0
  %616 = vmatpush1.bf16.msra.mxu0 %v589
  %617 = vmatprep.subr.bf16.mxu0 0
  %618 = vmatpush2.bf16.msra.mxu0 0
  %619 = vmatprep.subr.bf16.mxu0 0
  %620 = vmatpush2.bf16.msra.mxu0 0
  %621 = vmatprep.subr.bf16.mxu0 0
  %622 = vmatpush2.bf16.msra.mxu0 0
  %623 = vmatprep.subr.bf16.mxu0 0
  %624 = vmatpush2.bf16.msra.mxu0 0
  %625 = vmatprep.subr.bf16.mxu0 0
  %626 = vmatpush2.bf16.msra.mxu0 0
  %627 = vmatprep.subr.bf16.mxu0 0
  %628 = vmatpush2.bf16.msra.mxu0 0
  %629 = vmatprep.subr.bf16.mxu0 0
  %630 = vmatpush2.bf16.msra.mxu0 0
  %631 = vmatprep.subr.bf16.mxu0 0
  %632 = vmatpush2.bf16.msra.mxu0 0
  %633 = vmatprep.mubr.bf16.mxu0 0
  %634 = vmatmul.mubr.bf16.gmra.mxu0 %v599
  %v635 = vpop.f32.mrf.mxu0
  %v636 = vadd.f32 %v479, %v635
  %v637 = vpop.f32.mrf.mxu0
  %v638 = vpop.f32.mrf.mxu0
  %v639 = vpop.f32.mrf.mxu0
  %640 = vdwg.mxu0
  %v641 = vxor.u32 %v636, 2147483648
  %v642 = vmul.f32 %v641, 1.442695
  %v643 = vpow.pop %v642
  %v644 = vadd.f32 %v643, 1.0
  %v645 = vrcp.pop %v644
  %v646 = vmul.f32 1.0, %v645
  %648 = vrot.lane.b32.xlu0 %v636, 32
  %v649 = vpop.permute.xlu0 %648
  %v651 = vmul.f32 %v646, %v649
  %653 = vrot.lane.b32.xlu0 %v651, 64
  %v654 = vpop.permute.xlu0 %653
  %v656 = vadd.f32 %v636, %v654
  %v657 = vtanh.pop %v656
  %v658 = vsub.f32 1.0, %v646
  %660 = vrot.lane.b32.xlu0 %v657, 96
  %v661 = vpop.permute.xlu0 %660
  %v663 = vmul.f32 %v658, %v661
  %v664 = vmul.f32 %v646, %v350
  %v665 = vadd.f32 %v663, %v664
  %v666 = vpack.c.bf16 %v566, %v566
  %668 = vrot.lane.b32.xlu0 %v666, 96
  %v669 = vpop.permute.xlu0 %668
  %v671 = vsel %vm197, %v669, 0
  %673 = vmatprep.subr.bf16.mxu0 0
  %674 = vmatpush1.bf16.msra.mxu0 0
  %675 = vmatprep.subr.bf16.mxu0 0
  %676 = vmatpush1.bf16.msra.mxu0 0
  %677 = vmatprep.subr.bf16.mxu0 0
  %678 = vmatpush1.bf16.msra.mxu0 0
  %679 = vmatprep.subr.bf16.mxu0 0
  %680 = vmatpush1.bf16.msra.mxu0 0
  %681 = vmatprep.subr.bf16.mxu0 0
  %682 = vmatpush1.bf16.msra.mxu0 0
  %683 = vmatprep.subr.bf16.mxu0 0
  %684 = vmatpush1.bf16.msra.mxu0 0
  %685 = vmatprep.subr.bf16.mxu0 0
  %686 = vmatpush1.bf16.msra.mxu0 %v491
  %687 = vmatprep.subr.bf16.mxu0 0
  %688 = vmatpush1.bf16.msra.mxu0 %v490
  %689 = vmatprep.subr.bf16.mxu0 0
  %690 = vmatpush2.bf16.msra.mxu0 0
  %691 = vmatprep.subr.bf16.mxu0 0
  %692 = vmatpush2.bf16.msra.mxu0 0
  %693 = vmatprep.subr.bf16.mxu0 0
  %694 = vmatpush2.bf16.msra.mxu0 0
  %695 = vmatprep.subr.bf16.mxu0 0
  %696 = vmatpush2.bf16.msra.mxu0 0
  %697 = vmatprep.subr.bf16.mxu0 0
  %698 = vmatpush2.bf16.msra.mxu0 0
  %699 = vmatprep.subr.bf16.mxu0 0
  %700 = vmatpush2.bf16.msra.mxu0 0
  %701 = vmatprep.subr.bf16.mxu0 0
  %702 = vmatpush2.bf16.msra.mxu0 0
  %703 = vmatprep.subr.bf16.mxu0 0
  %704 = vmatpush2.bf16.msra.mxu0 0
  %705 = vmatprep.mubr.bf16.mxu0 0
  %706 = vmatmul.mubr.bf16.gmra.mxu0 %v671
  %v707 = vpop.f32.mrf.mxu0
  %v708 = vadd.f32 %v464, %v707
  %v709 = vpop.f32.mrf.mxu0
  %v710 = vpop.f32.mrf.mxu0
  %v711 = vpop.f32.mrf.mxu0
  %712 = vdwg.mxu0
  %v713 = vadd.f32 %v428, %v708
  %v714 = vxor.u32 %v713, 2147483648
  %v715 = vmul.f32 %v714, 1.442695
  %v716 = vpow.pop %v715
  %v717 = vadd.f32 %v716, 1.0
  %v718 = vrcp.pop %v717
  %v719 = vmul.f32 1.0, %v718
  %721 = vrot.lane.b32.xlu0 %v708, 64
  %v722 = vpop.permute.xlu0 %721
  %v724 = vmul.f32 %v719, %v722
  %726 = vrot.lane.b32.xlu0 %v724, 64
  %v727 = vpop.permute.xlu0 %726
  %v729 = vadd.f32 %v428, %v727
  %v730 = vtanh.pop %v729
  %v731 = vsub.f32 1.0, %v719
  %733 = vrot.lane.b32.xlu0 %v730, 96
  %v734 = vpop.permute.xlu0 %733
  %v736 = vmul.f32 %v731, %v734
  %v737 = vmul.f32 %v719, %v566
  %v738 = vadd.f32 %v736, %v737
  %740 = vrot.lane.b32.xlu0 %v738, 96
  %v741 = vpop.permute.xlu0 %740
  %v743 = vsel %vm197, %v741, %v665
  %v744 = vpack.c.bf16 %v743, %v743
  %v746 = vsel %vm597, %v744, 0
  %748 = vmatprep.subr.bf16.mxu0 0
  %749 = vmatpush1.bf16.msra.mxu0 0
  %750 = vmatprep.subr.bf16.mxu0 0
  %751 = vmatpush1.bf16.msra.mxu0 0
  %752 = vmatprep.subr.bf16.mxu0 0
  %753 = vmatpush1.bf16.msra.mxu0 0
  %754 = vmatprep.subr.bf16.mxu0 0
  %755 = vmatpush1.bf16.msra.mxu0 0
  %756 = vmatprep.subr.bf16.mxu0 0
  %757 = vmatpush1.bf16.msra.mxu0 %v592
  %758 = vmatprep.subr.bf16.mxu0 0
  %759 = vmatpush1.bf16.msra.mxu0 %v591
  %760 = vmatprep.subr.bf16.mxu0 0
  %761 = vmatpush1.bf16.msra.mxu0 %v590
  %762 = vmatprep.subr.bf16.mxu0 0
  %763 = vmatpush1.bf16.msra.mxu0 %v589
  %764 = vmatprep.subr.bf16.mxu0 0
  %765 = vmatpush2.bf16.msra.mxu0 0
  %766 = vmatprep.subr.bf16.mxu0 0
  %767 = vmatpush2.bf16.msra.mxu0 0
  %768 = vmatprep.subr.bf16.mxu0 0
  %769 = vmatpush2.bf16.msra.mxu0 0
  %770 = vmatprep.subr.bf16.mxu0 0
  %771 = vmatpush2.bf16.msra.mxu0 0
  %772 = vmatprep.subr.bf16.mxu0 0
  %773 = vmatpush2.bf16.msra.mxu0 0
  %774 = vmatprep.subr.bf16.mxu0 0
  %775 = vmatpush2.bf16.msra.mxu0 0
  %776 = vmatprep.subr.bf16.mxu0 0
  %777 = vmatpush2.bf16.msra.mxu0 0
  %778 = vmatprep.subr.bf16.mxu0 0
  %779 = vmatpush2.bf16.msra.mxu0 0
  %780 = vmatprep.mubr.bf16.mxu0 0
  %781 = vmatmul.mubr.bf16.gmra.mxu0 %v746
  %v782 = vpop.f32.mrf.mxu0
  %v783 = vadd.f32 %v479, %v782
  %v784 = vpop.f32.mrf.mxu0
  %v785 = vpop.f32.mrf.mxu0
  %v786 = vpop.f32.mrf.mxu0
  %787 = vdwg.mxu0
  %v788 = vxor.u32 %v783, 2147483648
  %v789 = vmul.f32 %v788, 1.442695
  %v790 = vpow.pop %v789
  %v791 = vadd.f32 %v790, 1.0
  %v792 = vrcp.pop %v791
  %v793 = vmul.f32 1.0, %v792
  %795 = vrot.lane.b32.xlu0 %v783, 32
  %v796 = vpop.permute.xlu0 %795
  %v798 = vmul.f32 %v793, %v796
  %800 = vrot.lane.b32.xlu0 %v798, 64
  %v801 = vpop.permute.xlu0 %800
  %v803 = vadd.f32 %v783, %v801
  %v804 = vtanh.pop %v803
  %v805 = vsub.f32 1.0, %v793
  %807 = vrot.lane.b32.xlu0 %v804, 96
  %v808 = vpop.permute.xlu0 %807
  %v810 = vmul.f32 %v805, %v808
  %v811 = vmul.f32 %v793, %v665
  %v812 = vadd.f32 %v810, %v811
  %v813 = vpack.c.bf16 %v738, %v738
  %815 = vrot.lane.b32.xlu0 %v813, 96
  %v816 = vpop.permute.xlu0 %815
  %v818 = vsel %vm197, %v816, 0
  %820 = vmatprep.subr.bf16.mxu0 0
  %821 = vmatpush1.bf16.msra.mxu0 0
  %822 = vmatprep.subr.bf16.mxu0 0
  %823 = vmatpush1.bf16.msra.mxu0 0
  %824 = vmatprep.subr.bf16.mxu0 0
  %825 = vmatpush1.bf16.msra.mxu0 0
  %826 = vmatprep.subr.bf16.mxu0 0
  %827 = vmatpush1.bf16.msra.mxu0 0
  %828 = vmatprep.subr.bf16.mxu0 0
  %829 = vmatpush1.bf16.msra.mxu0 0
  %830 = vmatprep.subr.bf16.mxu0 0
  %831 = vmatpush1.bf16.msra.mxu0 0
  %832 = vmatprep.subr.bf16.mxu0 0
  %833 = vmatpush1.bf16.msra.mxu0 %v491
  %834 = vmatprep.subr.bf16.mxu0 0
  %835 = vmatpush1.bf16.msra.mxu0 %v490
  %836 = vmatprep.subr.bf16.mxu0 0
  %837 = vmatpush2.bf16.msra.mxu0 0
  %838 = vmatprep.subr.bf16.mxu0 0
  %839 = vmatpush2.bf16.msra.mxu0 0
  %840 = vmatprep.subr.bf16.mxu0 0
  %841 = vmatpush2.bf16.msra.mxu0 0
  %842 = vmatprep.subr.bf16.mxu0 0
  %843 = vmatpush2.bf16.msra.mxu0 0
  %844 = vmatprep.subr.bf16.mxu0 0
  %845 = vmatpush2.bf16.msra.mxu0 0
  %846 = vmatprep.subr.bf16.mxu0 0
  %847 = vmatpush2.bf16.msra.mxu0 0
  %848 = vmatprep.subr.bf16.mxu0 0
  %849 = vmatpush2.bf16.msra.mxu0 0
  %850 = vmatprep.subr.bf16.mxu0 0
  %851 = vmatpush2.bf16.msra.mxu0 0
  %852 = vmatprep.mubr.bf16.mxu0 0
  %853 = vmatmul.mubr.bf16.gmra.mxu0 %v818
  %v854 = vpop.f32.mrf.mxu0
  %v855 = vadd.f32 %v464, %v854
  %v856 = vpop.f32.mrf.mxu0
  %v857 = vpop.f32.mrf.mxu0
  %v858 = vpop.f32.mrf.mxu0
  %859 = vdwg.mxu0
  %v860 = vadd.f32 %v433, %v855
  %v861 = vxor.u32 %v860, 2147483648
  %v862 = vmul.f32 %v861, 1.442695
  %v863 = vpow.pop %v862
  %v864 = vadd.f32 %v863, 1.0
  %v865 = vrcp.pop %v864
  %v866 = vmul.f32 1.0, %v865
  %868 = vrot.lane.b32.xlu0 %v855, 64
  %v869 = vpop.permute.xlu0 %868
  %v871 = vmul.f32 %v866, %v869
  %873 = vrot.lane.b32.xlu0 %v871, 64
  %v874 = vpop.permute.xlu0 %873
  %v876 = vadd.f32 %v433, %v874
  %v877 = vtanh.pop %v876
  %v878 = vsub.f32 1.0, %v866
  %880 = vrot.lane.b32.xlu0 %v877, 96
  %v881 = vpop.permute.xlu0 %880
  %v883 = vmul.f32 %v878, %v881
  %v884 = vmul.f32 %v866, %v738
  %v885 = vadd.f32 %v883, %v884
  %887 = vrot.lane.b32.xlu0 %v885, 96
  %v888 = vpop.permute.xlu0 %887
  %v890 = vsel %vm197, %v888, %v812
  %v891 = vpack.c.bf16 %v890, %v890
  %v893 = vsel %vm597, %v891, 0
  %895 = vmatprep.subr.bf16.mxu0 0
  %896 = vmatpush1.bf16.msra.mxu0 0
  %897 = vmatprep.subr.bf16.mxu0 0
  %898 = vmatpush1.bf16.msra.mxu0 0
  %899 = vmatprep.subr.bf16.mxu0 0
  %900 = vmatpush1.bf16.msra.mxu0 0
  %901 = vmatprep.subr.bf16.mxu0 0
  %902 = vmatpush1.bf16.msra.mxu0 0
  %903 = vmatprep.subr.bf16.mxu0 0
  %904 = vmatpush1.bf16.msra.mxu0 %v592
  %905 = vmatprep.subr.bf16.mxu0 0
  %906 = vmatpush1.bf16.msra.mxu0 %v591
  %907 = vmatprep.subr.bf16.mxu0 0
  %908 = vmatpush1.bf16.msra.mxu0 %v590
  %909 = vmatprep.subr.bf16.mxu0 0
  %910 = vmatpush1.bf16.msra.mxu0 %v589
  %911 = vmatprep.subr.bf16.mxu0 0
  %912 = vmatpush2.bf16.msra.mxu0 0
  %913 = vmatprep.subr.bf16.mxu0 0
  %914 = vmatpush2.bf16.msra.mxu0 0
  %915 = vmatprep.subr.bf16.mxu0 0
  %916 = vmatpush2.bf16.msra.mxu0 0
  %917 = vmatprep.subr.bf16.mxu0 0
  %918 = vmatpush2.bf16.msra.mxu0 0
  %919 = vmatprep.subr.bf16.mxu0 0
  %920 = vmatpush2.bf16.msra.mxu0 0
  %921 = vmatprep.subr.bf16.mxu0 0
  %922 = vmatpush2.bf16.msra.mxu0 0
  %923 = vmatprep.subr.bf16.mxu0 0
  %924 = vmatpush2.bf16.msra.mxu0 0
  %925 = vmatprep.subr.bf16.mxu0 0
  %926 = vmatpush2.bf16.msra.mxu0 0
  %927 = vmatprep.mubr.bf16.mxu0 0
  %928 = vmatmul.mubr.bf16.gmra.mxu0 %v893
  %v929 = vpop.f32.mrf.mxu0
  %v930 = vadd.f32 %v479, %v929
  %v931 = vpop.f32.mrf.mxu0
  %v932 = vpop.f32.mrf.mxu0
  %v933 = vpop.f32.mrf.mxu0
  %934 = vdwg.mxu0
  %v935 = vxor.u32 %v930, 2147483648
  %v936 = vmul.f32 %v935, 1.442695
  %v937 = vpow.pop %v936
  %v938 = vadd.f32 %v937, 1.0
  %v939 = vrcp.pop %v938
  %v940 = vmul.f32 1.0, %v939
  %942 = vrot.lane.b32.xlu0 %v930, 32
  %v943 = vpop.permute.xlu0 %942
  %v945 = vmul.f32 %v940, %v943
  %947 = vrot.lane.b32.xlu0 %v945, 64
  %v948 = vpop.permute.xlu0 %947
  %v950 = vadd.f32 %v930, %v948
  %v951 = vtanh.pop %v950
  %v952 = vsub.f32 1.0, %v940
  %954 = vrot.lane.b32.xlu0 %v951, 96
  %v955 = vpop.permute.xlu0 %954
  %v957 = vmul.f32 %v952, %v955
  %v958 = vmul.f32 %v940, %v812
  %v959 = vadd.f32 %v957, %v958
  %v960 = vpack.c.bf16 %v885, %v885
  %962 = vrot.lane.b32.xlu0 %v960, 96
  %v963 = vpop.permute.xlu0 %962
  %v965 = vsel %vm197, %v963, 0
  %967 = vmatprep.subr.bf16.mxu0 0
  %968 = vmatpush1.bf16.msra.mxu0 0
  %969 = vmatprep.subr.bf16.mxu0 0
  %970 = vmatpush1.bf16.msra.mxu0 0
  %971 = vmatprep.subr.bf16.mxu0 0
  %972 = vmatpush1.bf16.msra.mxu0 0
  %973 = vmatprep.subr.bf16.mxu0 0
  %974 = vmatpush1.bf16.msra.mxu0 0
  %975 = vmatprep.subr.bf16.mxu0 0
  %976 = vmatpush1.bf16.msra.mxu0 0
  %977 = vmatprep.subr.bf16.mxu0 0
  %978 = vmatpush1.bf16.msra.mxu0 0
  %979 = vmatprep.subr.bf16.mxu0 0
  %980 = vmatpush1.bf16.msra.mxu0 %v491
  %981 = vmatprep.subr.bf16.mxu0 0
  %982 = vmatpush1.bf16.msra.mxu0 %v490
  %983 = vmatprep.subr.bf16.mxu0 0
  %984 = vmatpush2.bf16.msra.mxu0 0
  %985 = vmatprep.subr.bf16.mxu0 0
  %986 = vmatpush2.bf16.msra.mxu0 0
  %987 = vmatprep.subr.bf16.mxu0 0
  %988 = vmatpush2.bf16.msra.mxu0 0
  %989 = vmatprep.subr.bf16.mxu0 0
  %990 = vmatpush2.bf16.msra.mxu0 0
  %991 = vmatprep.subr.bf16.mxu0 0
  %992 = vmatpush2.bf16.msra.mxu0 0
  %993 = vmatprep.subr.bf16.mxu0 0
  %994 = vmatpush2.bf16.msra.mxu0 0
  %995 = vmatprep.subr.bf16.mxu0 0
  %996 = vmatpush2.bf16.msra.mxu0 0
  %997 = vmatprep.subr.bf16.mxu0 0
  %998 = vmatpush2.bf16.msra.mxu0 0
  %999 = vmatprep.mubr.bf16.mxu0 0
  %1000 = vmatmul.mubr.bf16.gmra.mxu0 %v965
  %v1001 = vpop.f32.mrf.mxu0
  %v1002 = vadd.f32 %v464, %v1001
  %v1003 = vpop.f32.mrf.mxu0
  %v1004 = vpop.f32.mrf.mxu0
  %v1005 = vpop.f32.mrf.mxu0
  %1006 = vdwg.mxu0
  %v1007 = vadd.f32 %v436, %v1002
  %v1008 = vxor.u32 %v1007, 2147483648
  %v1009 = vmul.f32 %v1008, 1.442695
  %v1010 = vpow.pop %v1009
  %v1011 = vadd.f32 %v1010, 1.0
  %v1012 = vrcp.pop %v1011
  %v1013 = vmul.f32 1.0, %v1012
  %1015 = vrot.lane.b32.xlu0 %v1002, 64
  %v1016 = vpop.permute.xlu0 %1015
  %v1018 = vmul.f32 %v1013, %v1016
  %1020 = vrot.lane.b32.xlu0 %v1018, 64
  %v1021 = vpop.permute.xlu0 %1020
  %v1023 = vadd.f32 %v436, %v1021
  %v1024 = vtanh.pop %v1023
  %v1025 = vsub.f32 1.0, %v1013
  %1027 = vrot.lane.b32.xlu0 %v1024, 96
  %v1028 = vpop.permute.xlu0 %1027
  %v1030 = vmul.f32 %v1025, %v1028
  %v1031 = vmul.f32 %v1013, %v885
  %v1032 = vadd.f32 %v1030, %v1031
  %1034 = vrot.lane.b32.xlu0 %v1032, 96
  %v1035 = vpop.permute.xlu0 %1034
  %v1037 = vsel %vm197, %v1035, %v959
  %v1038 = vpack.c.bf16 %v1037, %v1037
  %v1040 = vsel %vm597, %v1038, 0
  %1042 = vmatprep.subr.bf16.mxu0 0
  %1043 = vmatpush1.bf16.msra.mxu0 0
  %1044 = vmatprep.subr.bf16.mxu0 0
  %1045 = vmatpush1.bf16.msra.mxu0 0
  %1046 = vmatprep.subr.bf16.mxu0 0
  %1047 = vmatpush1.bf16.msra.mxu0 0
  %1048 = vmatprep.subr.bf16.mxu0 0
  %1049 = vmatpush1.bf16.msra.mxu0 0
  %1050 = vmatprep.subr.bf16.mxu0 0
  %1051 = vmatpush1.bf16.msra.mxu0 %v592
  %1052 = vmatprep.subr.bf16.mxu0 0
  %1053 = vmatpush1.bf16.msra.mxu0 %v591
  %1054 = vmatprep.subr.bf16.mxu0 0
  %1055 = vmatpush1.bf16.msra.mxu0 %v590
  %1056 = vmatprep.subr.bf16.mxu0 0
  %1057 = vmatpush1.bf16.msra.mxu0 %v589
  %1058 = vmatprep.subr.bf16.mxu0 0
  %1059 = vmatpush2.bf16.msra.mxu0 0
  %1060 = vmatprep.subr.bf16.mxu0 0
  %1061 = vmatpush2.bf16.msra.mxu0 0
  %1062 = vmatprep.subr.bf16.mxu0 0
  %1063 = vmatpush2.bf16.msra.mxu0 0
  %1064 = vmatprep.subr.bf16.mxu0 0
  %1065 = vmatpush2.bf16.msra.mxu0 0
  %1066 = vmatprep.subr.bf16.mxu0 0
  %1067 = vmatpush2.bf16.msra.mxu0 0
  %1068 = vmatprep.subr.bf16.mxu0 0
  %1069 = vmatpush2.bf16.msra.mxu0 0
  %1070 = vmatprep.subr.bf16.mxu0 0
  %1071 = vmatpush2.bf16.msra.mxu0 0
  %1072 = vmatprep.subr.bf16.mxu0 0
  %1073 = vmatpush2.bf16.msra.mxu0 0
  %1074 = vmatprep.mubr.bf16.mxu0 0
  %1075 = vmatmul.mubr.bf16.gmra.mxu0 %v1040
  %v1076 = vpop.f32.mrf.mxu0
  %v1077 = vadd.f32 %v479, %v1076
  %v1078 = vpop.f32.mrf.mxu0
  %v1079 = vpop.f32.mrf.mxu0
  %v1080 = vpop.f32.mrf.mxu0
  %1081 = vdwg.mxu0
  %v1082 = vxor.u32 %v1077, 2147483648
  %v1083 = vmul.f32 %v1082, 1.442695
  %v1084 = vpow.pop %v1083
  %v1085 = vadd.f32 %v1084, 1.0
  %v1086 = vrcp.pop %v1085
  %v1087 = vmul.f32 1.0, %v1086
  %1089 = vrot.lane.b32.xlu0 %v1077, 32
  %v1090 = vpop.permute.xlu0 %1089
  %v1092 = vmul.f32 %v1087, %v1090
  %1094 = vrot.lane.b32.xlu0 %v1092, 64
  %v1095 = vpop.permute.xlu0 %1094
  %v1097 = vadd.f32 %v1077, %v1095
  %v1098 = vtanh.pop %v1097
  %v1099 = vsub.f32 1.0, %v1087
  %1101 = vrot.lane.b32.xlu0 %v1098, 96
  %v1102 = vpop.permute.xlu0 %1101
  %v1104 = vmul.f32 %v1099, %v1102
  %v1105 = vmul.f32 %v1087, %v959
  %v1106 = vadd.f32 %v1104, %v1105
  %v1107 = vpack.c.bf16 %v1032, %v1032
  %1109 = vrot.lane.b32.xlu0 %v1107, 96
  %v1110 = vpop.permute.xlu0 %1109
  %v1112 = vsel %vm197, %v1110, 0
  %1114 = vmatprep.subr.bf16.mxu0 0
  %1115 = vmatpush1.bf16.msra.mxu0 0
  %1116 = vmatprep.subr.bf16.mxu0 0
  %1117 = vmatpush1.bf16.msra.mxu0 0
  %1118 = vmatprep.subr.bf16.mxu0 0
  %1119 = vmatpush1.bf16.msra.mxu0 0
  %1120 = vmatprep.subr.bf16.mxu0 0
  %1121 = vmatpush1.bf16.msra.mxu0 0
  %1122 = vmatprep.subr.bf16.mxu0 0
  %1123 = vmatpush1.bf16.msra.mxu0 0
  %1124 = vmatprep.subr.bf16.mxu0 0
  %1125 = vmatpush1.bf16.msra.mxu0 0
  %1126 = vmatprep.subr.bf16.mxu0 0
  %1127 = vmatpush1.bf16.msra.mxu0 %v491
  %1128 = vmatprep.subr.bf16.mxu0 0
  %1129 = vmatpush1.bf16.msra.mxu0 %v490
  %1130 = vmatprep.subr.bf16.mxu0 0
  %1131 = vmatpush2.bf16.msra.mxu0 0
  %1132 = vmatprep.subr.bf16.mxu0 0
  %1133 = vmatpush2.bf16.msra.mxu0 0
  %1134 = vmatprep.subr.bf16.mxu0 0
  %1135 = vmatpush2.bf16.msra.mxu0 0
  %1136 = vmatprep.subr.bf16.mxu0 0
  %1137 = vmatpush2.bf16.msra.mxu0 0
  %1138 = vmatprep.subr.bf16.mxu0 0
  %1139 = vmatpush2.bf16.msra.mxu0 0
  %1140 = vmatprep.subr.bf16.mxu0 0
  %1141 = vmatpush2.bf16.msra.mxu0 0
  %1142 = vmatprep.subr.bf16.mxu0 0
  %1143 = vmatpush2.bf16.msra.mxu0 0
  %1144 = vmatprep.subr.bf16.mxu0 0
  %1145 = vmatpush2.bf16.msra.mxu0 0
  %1146 = vmatprep.mubr.bf16.mxu0 0
  %1147 = vmatmul.mubr.bf16.gmra.mxu0 %v1112
  %v1148 = vpop.f32.mrf.mxu0
  %v1149 = vadd.f32 %v464, %v1148
  %v1150 = vpop.f32.mrf.mxu0
  %v1151 = vpop.f32.mrf.mxu0
  %v1152 = vpop.f32.mrf.mxu0
  %1153 = vdwg.mxu0
  %v1154 = vadd.f32 %v441, %v1149
  %v1155 = vxor.u32 %v1154, 2147483648
  %v1156 = vmul.f32 %v1155, 1.442695
  %v1157 = vpow.pop %v1156
  %v1158 = vadd.f32 %v1157, 1.0
  %v1159 = vrcp.pop %v1158
  %v1160 = vmul.f32 1.0, %v1159
  %1162 = vrot.lane.b32.xlu0 %v1149, 64
  %v1163 = vpop.permute.xlu0 %1162
  %v1165 = vmul.f32 %v1160, %v1163
  %1167 = vrot.lane.b32.xlu0 %v1165, 64
  %v1168 = vpop.permute.xlu0 %1167
  %v1170 = vadd.f32 %v441, %v1168
  %v1171 = vtanh.pop %v1170
  %v1172 = vsub.f32 1.0, %v1160
  %1174 = vrot.lane.b32.xlu0 %v1171, 96
  %v1175 = vpop.permute.xlu0 %1174
  %v1177 = vmul.f32 %v1172, %v1175
  %v1178 = vmul.f32 %v1160, %v1032
  %v1179 = vadd.f32 %v1177, %v1178
  %1181 = vrot.lane.b32.xlu0 %v1179, 96
  %v1182 = vpop.permute.xlu0 %1181
  %v1184 = vsel %vm197, %v1182, %v1106
  %v1185 = vpack.c.bf16 %v1184, %v1184
  %v1187 = vsel %vm597, %v1185, 0
  %1189 = vmatprep.subr.bf16.mxu0 0
  %1190 = vmatpush1.bf16.msra.mxu0 0
  %1191 = vmatprep.subr.bf16.mxu0 0
  %1192 = vmatpush1.bf16.msra.mxu0 0
  %1193 = vmatprep.subr.bf16.mxu0 0
  %1194 = vmatpush1.bf16.msra.mxu0 0
  %1195 = vmatprep.subr.bf16.mxu0 0
  %1196 = vmatpush1.bf16.msra.mxu0 0
  %1197 = vmatprep.subr.bf16.mxu0 0
  %1198 = vmatpush1.bf16.msra.mxu0 %v592
  %1199 = vmatprep.subr.bf16.mxu0 0
  %1200 = vmatpush1.bf16.msra.mxu0 %v591
  %1201 = vmatprep.subr.bf16.mxu0 0
  %1202 = vmatpush1.bf16.msra.mxu0 %v590
  %1203 = vmatprep.subr.bf16.mxu0 0
  %1204 = vmatpush1.bf16.msra.mxu0 %v589
  %1205 = vmatprep.subr.bf16.mxu0 0
  %1206 = vmatpush2.bf16.msra.mxu0 0
  %1207 = vmatprep.subr.bf16.mxu0 0
  %1208 = vmatpush2.bf16.msra.mxu0 0
  %1209 = vmatprep.subr.bf16.mxu0 0
  %1210 = vmatpush2.bf16.msra.mxu0 0
  %1211 = vmatprep.subr.bf16.mxu0 0
  %1212 = vmatpush2.bf16.msra.mxu0 0
  %1213 = vmatprep.subr.bf16.mxu0 0
  %1214 = vmatpush2.bf16.msra.mxu0 0
  %1215 = vmatprep.subr.bf16.mxu0 0
  %1216 = vmatpush2.bf16.msra.mxu0 0
  %1217 = vmatprep.subr.bf16.mxu0 0
  %1218 = vmatpush2.bf16.msra.mxu0 0
  %1219 = vmatprep.subr.bf16.mxu0 0
  %1220 = vmatpush2.bf16.msra.mxu0 0
  %1221 = vmatprep.mubr.bf16.mxu0 0
  %1222 = vmatmul.mubr.bf16.gmra.mxu0 %v1187
  %v1223 = vpop.f32.mrf.mxu0
  %v1224 = vadd.f32 %v479, %v1223
  %v1225 = vpop.f32.mrf.mxu0
  %v1226 = vpop.f32.mrf.mxu0
  %v1227 = vpop.f32.mrf.mxu0
  %1228 = vdwg.mxu0
  %v1229 = vxor.u32 %v1224, 2147483648
  %v1230 = vmul.f32 %v1229, 1.442695
  %v1231 = vpow.pop %v1230
  %v1232 = vadd.f32 %v1231, 1.0
  %v1233 = vrcp.pop %v1232
  %v1234 = vmul.f32 1.0, %v1233
  %1236 = vrot.lane.b32.xlu0 %v1224, 32
  %v1237 = vpop.permute.xlu0 %1236
  %v1239 = vmul.f32 %v1234, %v1237
  %1241 = vrot.lane.b32.xlu0 %v1239, 64
  %v1242 = vpop.permute.xlu0 %1241
  %v1244 = vadd.f32 %v1224, %v1242
  %v1245 = vtanh.pop %v1244
  %v1246 = vsub.f32 1.0, %v1234
  %1248 = vrot.lane.b32.xlu0 %v1245, 96
  %v1249 = vpop.permute.xlu0 %1248
  %v1251 = vmul.f32 %v1246, %v1249
  %v1252 = vmul.f32 %v1234, %v1106
  %v1253 = vadd.f32 %v1251, %v1252
  %v1254 = vpack.c.bf16 %v1179, %v1179
  %1256 = vrot.lane.b32.xlu0 %v1254, 96
  %v1257 = vpop.permute.xlu0 %1256
  %v1259 = vsel %vm197, %v1257, 0
  %1261 = vmatprep.subr.bf16.mxu0 0
  %1262 = vmatpush1.bf16.msra.mxu0 0
  %1263 = vmatprep.subr.bf16.mxu0 0
  %1264 = vmatpush1.bf16.msra.mxu0 0
  %1265 = vmatprep.subr.bf16.mxu0 0
  %1266 = vmatpush1.bf16.msra.mxu0 0
  %1267 = vmatprep.subr.bf16.mxu0 0
  %1268 = vmatpush1.bf16.msra.mxu0 0
  %1269 = vmatprep.subr.bf16.mxu0 0
  %1270 = vmatpush1.bf16.msra.mxu0 0
  %1271 = vmatprep.subr.bf16.mxu0 0
  %1272 = vmatpush1.bf16.msra.mxu0 0
  %1273 = vmatprep.subr.bf16.mxu0 0
  %1274 = vmatpush1.bf16.msra.mxu0 %v491
  %1275 = vmatprep.subr.bf16.mxu0 0
  %1276 = vmatpush1.bf16.msra.mxu0 %v490
  %1277 = vmatprep.subr.bf16.mxu0 0
  %1278 = vmatpush2.bf16.msra.mxu0 0
  %1279 = vmatprep.subr.bf16.mxu0 0
  %1280 = vmatpush2.bf16.msra.mxu0 0
  %1281 = vmatprep.subr.bf16.mxu0 0
  %1282 = vmatpush2.bf16.msra.mxu0 0
  %1283 = vmatprep.subr.bf16.mxu0 0
  %1284 = vmatpush2.bf16.msra.mxu0 0
  %1285 = vmatprep.subr.bf16.mxu0 0
  %1286 = vmatpush2.bf16.msra.mxu0 0
  %1287 = vmatprep.subr.bf16.mxu0 0
  %1288 = vmatpush2.bf16.msra.mxu0 0
  %1289 = vmatprep.subr.bf16.mxu0 0
  %1290 = vmatpush2.bf16.msra.mxu0 0
  %1291 = vmatprep.subr.bf16.mxu0 0
  %1292 = vmatpush2.bf16.msra.mxu0 0
  %1293 = vmatprep.mubr.bf16.mxu0 0
  %1294 = vmatmul.mubr.bf16.gmra.mxu0 %v1259
  %v1295 = vpop.f32.mrf.mxu0
  %v1296 = vadd.f32 %v464, %v1295
  %v1297 = vpop.f32.mrf.mxu0
  %v1298 = vpop.f32.mrf.mxu0
  %v1299 = vpop.f32.mrf.mxu0
  %1300 = vdwg.mxu0
  %v1301 = vadd.f32 %v444, %v1296
  %v1302 = vxor.u32 %v1301, 2147483648
  %v1303 = vmul.f32 %v1302, 1.442695
  %v1304 = vpow.pop %v1303
  %v1305 = vadd.f32 %v1304, 1.0
  %v1306 = vrcp.pop %v1305
  %v1307 = vmul.f32 1.0, %v1306
  %1309 = vrot.lane.b32.xlu0 %v1296, 64
  %v1310 = vpop.permute.xlu0 %1309
  %v1312 = vmul.f32 %v1307, %v1310
  %1314 = vrot.lane.b32.xlu0 %v1312, 64
  %v1315 = vpop.permute.xlu0 %1314
  %v1317 = vadd.f32 %v444, %v1315
  %v1318 = vtanh.pop %v1317
  %v1319 = vsub.f32 1.0, %v1307
  %1321 = vrot.lane.b32.xlu0 %v1318, 96
  %v1322 = vpop.permute.xlu0 %1321
  %v1324 = vmul.f32 %v1319, %v1322
  %v1325 = vmul.f32 %v1307, %v1179
  %v1326 = vadd.f32 %v1324, %v1325
  %1328 = vrot.lane.b32.xlu0 %v1326, 96
  %v1329 = vpop.permute.xlu0 %1328
  %v1331 = vsel %vm197, %v1329, %v1253
  %v1332 = vpack.c.bf16 %v1331, %v1331
  %v1334 = vsel %vm597, %v1332, 0
  %1336 = vmatprep.subr.bf16.mxu0 0
  %1337 = vmatpush1.bf16.msra.mxu0 0
  %1338 = vmatprep.subr.bf16.mxu0 0
  %1339 = vmatpush1.bf16.msra.mxu0 0
  %1340 = vmatprep.subr.bf16.mxu0 0
  %1341 = vmatpush1.bf16.msra.mxu0 0
  %1342 = vmatprep.subr.bf16.mxu0 0
  %1343 = vmatpush1.bf16.msra.mxu0 0
  %1344 = vmatprep.subr.bf16.mxu0 0
  %1345 = vmatpush1.bf16.msra.mxu0 %v592
  %1346 = vmatprep.subr.bf16.mxu0 0
  %1347 = vmatpush1.bf16.msra.mxu0 %v591
  %1348 = vmatprep.subr.bf16.mxu0 0
  %1349 = vmatpush1.bf16.msra.mxu0 %v590
  %1350 = vmatprep.subr.bf16.mxu0 0
  %1351 = vmatpush1.bf16.msra.mxu0 %v589
  %1352 = vmatprep.subr.bf16.mxu0 0
  %1353 = vmatpush2.bf16.msra.mxu0 0
  %1354 = vmatprep.subr.bf16.mxu0 0
  %1355 = vmatpush2.bf16.msra.mxu0 0
  %1356 = vmatprep.subr.bf16.mxu0 0
  %1357 = vmatpush2.bf16.msra.mxu0 0
  %1358 = vmatprep.subr.bf16.mxu0 0
  %1359 = vmatpush2.bf16.msra.mxu0 0
  %1360 = vmatprep.subr.bf16.mxu0 0
  %1361 = vmatpush2.bf16.msra.mxu0 0
  %1362 = vmatprep.subr.bf16.mxu0 0
  %1363 = vmatpush2.bf16.msra.mxu0 0
  %1364 = vmatprep.subr.bf16.mxu0 0
  %1365 = vmatpush2.bf16.msra.mxu0 0
  %1366 = vmatprep.subr.bf16.mxu0 0
  %1367 = vmatpush2.bf16.msra.mxu0 0
  %1368 = vmatprep.mubr.bf16.mxu0 0
  %1369 = vmatmul.mubr.bf16.gmra.mxu0 %v1334
  %v1370 = vpop.f32.mrf.mxu0
  %v1371 = vadd.f32 %v479, %v1370
  %v1372 = vpop.f32.mrf.mxu0
  %v1373 = vpop.f32.mrf.mxu0
  %v1374 = vpop.f32.mrf.mxu0
  %1375 = vdwg.mxu0
  %v1376 = vxor.u32 %v1371, 2147483648
  %v1377 = vmul.f32 %v1376, 1.442695
  %v1378 = vpow.pop %v1377
  %v1379 = vadd.f32 %v1378, 1.0
  %v1380 = vrcp.pop %v1379
  %v1381 = vmul.f32 1.0, %v1380
  %1383 = vrot.lane.b32.xlu0 %v1371, 32
  %v1384 = vpop.permute.xlu0 %1383
  %v1386 = vmul.f32 %v1381, %v1384
  %1388 = vrot.lane.b32.xlu0 %v1386, 64
  %v1389 = vpop.permute.xlu0 %1388
  %v1391 = vadd.f32 %v1371, %v1389
  %v1392 = vtanh.pop %v1391
  %v1393 = vsub.f32 1.0, %v1381
  %1395 = vrot.lane.b32.xlu0 %v1392, 96
  %v1396 = vpop.permute.xlu0 %1395
  %v1398 = vmul.f32 %v1393, %v1396
  %v1399 = vmul.f32 %v1381, %v1253
  %v1400 = vadd.f32 %v1398, %v1399
  %v1401 = vpack.c.bf16 %v1326, %v1326
  %1403 = vrot.lane.b32.xlu0 %v1401, 96
  %v1404 = vpop.permute.xlu0 %1403
  %v1406 = vsel %vm197, %v1404, 0
  %1408 = vmatprep.subr.bf16.mxu0 0
  %1409 = vmatpush1.bf16.msra.mxu0 0
  %1410 = vmatprep.subr.bf16.mxu0 0
  %1411 = vmatpush1.bf16.msra.mxu0 0
  %1412 = vmatprep.subr.bf16.mxu0 0
  %1413 = vmatpush1.bf16.msra.mxu0 0
  %1414 = vmatprep.subr.bf16.mxu0 0
  %1415 = vmatpush1.bf16.msra.mxu0 0
  %1416 = vmatprep.subr.bf16.mxu0 0
  %1417 = vmatpush1.bf16.msra.mxu0 0
  %1418 = vmatprep.subr.bf16.mxu0 0
  %1419 = vmatpush1.bf16.msra.mxu0 0
  %1420 = vmatprep.subr.bf16.mxu0 0
  %1421 = vmatpush1.bf16.msra.mxu0 %v491
  %1422 = vmatprep.subr.bf16.mxu0 0
  %1423 = vmatpush1.bf16.msra.mxu0 %v490
  %1424 = vmatprep.subr.bf16.mxu0 0
  %1425 = vmatpush2.bf16.msra.mxu0 0
  %1426 = vmatprep.subr.bf16.mxu0 0
  %1427 = vmatpush2.bf16.msra.mxu0 0
  %1428 = vmatprep.subr.bf16.mxu0 0
  %1429 = vmatpush2.bf16.msra.mxu0 0
  %1430 = vmatprep.subr.bf16.mxu0 0
  %1431 = vmatpush2.bf16.msra.mxu0 0
  %1432 = vmatprep.subr.bf16.mxu0 0
  %1433 = vmatpush2.bf16.msra.mxu0 0
  %1434 = vmatprep.subr.bf16.mxu0 0
  %1435 = vmatpush2.bf16.msra.mxu0 0
  %1436 = vmatprep.subr.bf16.mxu0 0
  %1437 = vmatpush2.bf16.msra.mxu0 0
  %1438 = vmatprep.subr.bf16.mxu0 0
  %1439 = vmatpush2.bf16.msra.mxu0 0
  %1440 = vmatprep.mubr.bf16.mxu0 0
  %1441 = vmatmul.mubr.bf16.gmra.mxu0 %v1406
  %v1442 = vpop.f32.mrf.mxu0
  %v1443 = vadd.f32 %v464, %v1442
  %v1444 = vpop.f32.mrf.mxu0
  %v1445 = vpop.f32.mrf.mxu0
  %v1446 = vpop.f32.mrf.mxu0
  %1447 = vdwg.mxu0
  %v1448 = vadd.f32 %v449, %v1443
  %v1449 = vxor.u32 %v1448, 2147483648
  %v1450 = vmul.f32 %v1449, 1.442695
  %v1451 = vpow.pop %v1450
  %v1452 = vadd.f32 %v1451, 1.0
  %v1453 = vrcp.pop %v1452
  %v1454 = vmul.f32 1.0, %v1453
  %1456 = vrot.lane.b32.xlu0 %v1443, 64
  %v1457 = vpop.permute.xlu0 %1456
  %v1459 = vmul.f32 %v1454, %v1457
  %1461 = vrot.lane.b32.xlu0 %v1459, 64
  %v1462 = vpop.permute.xlu0 %1461
  %v1464 = vadd.f32 %v449, %v1462
  %v1465 = vtanh.pop %v1464
  %v1466 = vsub.f32 1.0, %v1454
  %1468 = vrot.lane.b32.xlu0 %v1465, 96
  %v1469 = vpop.permute.xlu0 %1468
  %v1471 = vmul.f32 %v1466, %v1469
  %v1472 = vmul.f32 %v1454, %v1326
  %v1473 = vadd.f32 %v1471, %v1472
  %1475 = vrot.lane.b32.xlu0 %v1473, 96
  %v1476 = vpop.permute.xlu0 %1475
  %v1478 = vsel %vm197, %v1476, %v1400
  %v1479 = vpack.c.bf16 %v1478, %v1478
  %v1481 = vsel %vm597, %v1479, 0
  %1483 = vmatprep.subr.bf16.mxu0 0
  %1484 = vmatpush1.bf16.msra.mxu0 0
  %1485 = vmatprep.subr.bf16.mxu0 0
  %1486 = vmatpush1.bf16.msra.mxu0 0
  %1487 = vmatprep.subr.bf16.mxu0 0
  %1488 = vmatpush1.bf16.msra.mxu0 0
  %1489 = vmatprep.subr.bf16.mxu0 0
  %1490 = vmatpush1.bf16.msra.mxu0 0
  %1491 = vmatprep.subr.bf16.mxu0 0
  %1492 = vmatpush1.bf16.msra.mxu0 %v592
  %1493 = vmatprep.subr.bf16.mxu0 0
  %1494 = vmatpush1.bf16.msra.mxu0 %v591
  %1495 = vmatprep.subr.bf16.mxu0 0
  %1496 = vmatpush1.bf16.msra.mxu0 %v590
  %1497 = vmatprep.subr.bf16.mxu0 0
  %1498 = vmatpush1.bf16.msra.mxu0 %v589
  %1499 = vmatprep.subr.bf16.mxu0 0
  %1500 = vmatpush2.bf16.msra.mxu0 0
  %1501 = vmatprep.subr.bf16.mxu0 0
  %1502 = vmatpush2.bf16.msra.mxu0 0
  %1503 = vmatprep.subr.bf16.mxu0 0
  %1504 = vmatpush2.bf16.msra.mxu0 0
  %1505 = vmatprep.subr.bf16.mxu0 0
  %1506 = vmatpush2.bf16.msra.mxu0 0
  %1507 = vmatprep.subr.bf16.mxu0 0
  %1508 = vmatpush2.bf16.msra.mxu0 0
  %1509 = vmatprep.subr.bf16.mxu0 0
  %1510 = vmatpush2.bf16.msra.mxu0 0
  %1511 = vmatprep.subr.bf16.mxu0 0
  %1512 = vmatpush2.bf16.msra.mxu0 0
  %1513 = vmatprep.subr.bf16.mxu0 0
  %1514 = vmatpush2.bf16.msra.mxu0 0
  %1515 = vmatprep.mubr.bf16.mxu0 0
  %1516 = vmatmul.mubr.bf16.gmra.mxu0 %v1481
  %v1517 = vpop.f32.mrf.mxu0
  %v1518 = vadd.f32 %v479, %v1517
  %v1519 = vpop.f32.mrf.mxu0
  %v1520 = vpop.f32.mrf.mxu0
  %v1521 = vpop.f32.mrf.mxu0
  %1522 = vdwg.mxu0
  %v1523 = vxor.u32 %v1518, 2147483648
  %v1524 = vmul.f32 %v1523, 1.442695
  %v1525 = vpow.pop %v1524
  %v1526 = vadd.f32 %v1525, 1.0
  %v1527 = vrcp.pop %v1526
  %v1528 = vmul.f32 1.0, %v1527
  %1530 = vrot.lane.b32.xlu0 %v1518, 32
  %v1531 = vpop.permute.xlu0 %1530
  %v1533 = vmul.f32 %v1528, %v1531
  %1535 = vrot.lane.b32.xlu0 %v1533, 64
  %v1536 = vpop.permute.xlu0 %1535
  %v1538 = vadd.f32 %v1518, %v1536
  %v1539 = vtanh.pop %v1538
  %v1540 = vsub.f32 1.0, %v1528
  %1542 = vrot.lane.b32.xlu0 %v1539, 96
  %v1543 = vpop.permute.xlu0 %1542
  %v1545 = vmul.f32 %v1540, %v1543
  %v1546 = vmul.f32 %v1528, %v1400
  %v1547 = vadd.f32 %v1545, %v1546
  %v1548 = vpack.c.bf16 %v1473, %v1473
  %1550 = vrot.lane.b32.xlu0 %v1548, 96
  %v1551 = vpop.permute.xlu0 %1550
  %v1553 = vsel %vm197, %v1551, 0
  %1555 = vmatprep.subr.bf16.mxu0 0
  %1556 = vmatpush1.bf16.msra.mxu0 0
  %1557 = vmatprep.subr.bf16.mxu0 0
  %1558 = vmatpush1.bf16.msra.mxu0 0
  %1559 = vmatprep.subr.bf16.mxu0 0
  %1560 = vmatpush1.bf16.msra.mxu0 0
  %1561 = vmatprep.subr.bf16.mxu0 0
  %1562 = vmatpush1.bf16.msra.mxu0 0
  %1563 = vmatprep.subr.bf16.mxu0 0
  %1564 = vmatpush1.bf16.msra.mxu0 0
  %1565 = vmatprep.subr.bf16.mxu0 0
  %1566 = vmatpush1.bf16.msra.mxu0 0
  %1567 = vmatprep.subr.bf16.mxu0 0
  %1568 = vmatpush1.bf16.msra.mxu0 %v491
  %1569 = vmatprep.subr.bf16.mxu0 0
  %1570 = vmatpush1.bf16.msra.mxu0 %v490
  %1571 = vmatprep.subr.bf16.mxu0 0
  %1572 = vmatpush2.bf16.msra.mxu0 0
  %1573 = vmatprep.subr.bf16.mxu0 0
  %1574 = vmatpush2.bf16.msra.mxu0 0
  %1575 = vmatprep.subr.bf16.mxu0 0
  %1576 = vmatpush2.bf16.msra.mxu0 0
  %1577 = vmatprep.subr.bf16.mxu0 0
  %1578 = vmatpush2.bf16.msra.mxu0 0
  %1579 = vmatprep.subr.bf16.mxu0 0
  %1580 = vmatpush2.bf16.msra.mxu0 0
  %1581 = vmatprep.subr.bf16.mxu0 0
  %1582 = vmatpush2.bf16.msra.mxu0 0
  %1583 = vmatprep.subr.bf16.mxu0 0
  %1584 = vmatpush2.bf16.msra.mxu0 0
  %1585 = vmatprep.subr.bf16.mxu0 0
  %1586 = vmatpush2.bf16.msra.mxu0 0
  %1587 = vmatprep.mubr.bf16.mxu0 0
  %1588 = vmatmul.mubr.bf16.gmra.mxu0 %v1553
  %v1589 = vpop.f32.mrf.mxu0
  %v1590 = vadd.f32 %v464, %v1589
  %v1591 = vpop.f32.mrf.mxu0
  %v1592 = vpop.f32.mrf.mxu0
  %v1593 = vpop.f32.mrf.mxu0
  %1594 = vdwg.mxu0
  %v1595 = vadd.f32 %v452, %v1590
  %v1596 = vxor.u32 %v1595, 2147483648
  %v1597 = vmul.f32 %v1596, 1.442695
  %v1598 = vpow.pop %v1597
  %v1599 = vadd.f32 %v1598, 1.0
  %v1600 = vrcp.pop %v1599
  %v1601 = vmul.f32 1.0, %v1600
  %1603 = vrot.lane.b32.xlu0 %v1590, 64
  %v1604 = vpop.permute.xlu0 %1603
  %v1606 = vmul.f32 %v1601, %v1604
  %1608 = vrot.lane.b32.xlu0 %v1606, 64
  %v1609 = vpop.permute.xlu0 %1608
  %v1611 = vadd.f32 %v452, %v1609
  %v1612 = vtanh.pop %v1611
  %v1613 = vsub.f32 1.0, %v1601
  %1615 = vrot.lane.b32.xlu0 %v1612, 96
  %v1616 = vpop.permute.xlu0 %1615
  %v1618 = vmul.f32 %v1613, %v1616
  %v1619 = vmul.f32 %v1601, %v1473
  %v1620 = vadd.f32 %v1618, %v1619
  %1622 = vrot.lane.b32.xlu0 %v1620, 96
  %v1623 = vpop.permute.xlu0 %1622
  %v1625 = vsel %vm197, %v1623, %v1547
  %v1626 = vpack.c.bf16 %v1625, %v1625
  %v1628 = vsel %vm597, %v1626, 0
  %1630 = vmatprep.subr.bf16.mxu0 0
  %1631 = vmatpush1.bf16.msra.mxu0 0
  %1632 = vmatprep.subr.bf16.mxu0 0
  %1633 = vmatpush1.bf16.msra.mxu0 0
  %1634 = vmatprep.subr.bf16.mxu0 0
  %1635 = vmatpush1.bf16.msra.mxu0 0
  %1636 = vmatprep.subr.bf16.mxu0 0
  %1637 = vmatpush1.bf16.msra.mxu0 0
  %1638 = vmatprep.subr.bf16.mxu0 0
  %1639 = vmatpush1.bf16.msra.mxu0 %v592
  %1640 = vmatprep.subr.bf16.mxu0 0
  %1641 = vmatpush1.bf16.msra.mxu0 %v591
  %1642 = vmatprep.subr.bf16.mxu0 0
  %1643 = vmatpush1.bf16.msra.mxu0 %v590
  %1644 = vmatprep.subr.bf16.mxu0 0
  %1645 = vmatpush1.bf16.msra.mxu0 %v589
  %1646 = vmatprep.subr.bf16.mxu0 0
  %1647 = vmatpush2.bf16.msra.mxu0 0
  %1648 = vmatprep.subr.bf16.mxu0 0
  %1649 = vmatpush2.bf16.msra.mxu0 0
  %1650 = vmatprep.subr.bf16.mxu0 0
  %1651 = vmatpush2.bf16.msra.mxu0 0
  %1652 = vmatprep.subr.bf16.mxu0 0
  %1653 = vmatpush2.bf16.msra.mxu0 0
  %1654 = vmatprep.subr.bf16.mxu0 0
  %1655 = vmatpush2.bf16.msra.mxu0 0
  %1656 = vmatprep.subr.bf16.mxu0 0
  %1657 = vmatpush2.bf16.msra.mxu0 0
  %1658 = vmatprep.subr.bf16.mxu0 0
  %1659 = vmatpush2.bf16.msra.mxu0 0
  %1660 = vmatprep.subr.bf16.mxu0 0
  %1661 = vmatpush2.bf16.msra.mxu0 0
  %1662 = vmatprep.mubr.bf16.mxu0 0
  %1663 = vmatmul.mubr.bf16.gmra.mxu0 %v1628
  %v1664 = vpop.f32.mrf.mxu0
  %v1665 = vadd.f32 %v479, %v1664
  %v1666 = vpop.f32.mrf.mxu0
  %v1667 = vpop.f32.mrf.mxu0
  %v1668 = vpop.f32.mrf.mxu0
  %1669 = vdwg.mxu0
  %v1670 = vxor.u32 %v1665, 2147483648
  %v1671 = vmul.f32 %v1670, 1.442695
  %v1672 = vpow.pop %v1671
  %v1673 = vadd.f32 %v1672, 1.0
  %v1674 = vrcp.pop %v1673
  %v1675 = vmul.f32 1.0, %v1674
  %1677 = vrot.lane.b32.xlu0 %v1665, 32
  %v1678 = vpop.permute.xlu0 %1677
  %v1680 = vmul.f32 %v1675, %v1678
  %1682 = vrot.lane.b32.xlu0 %v1680, 64
  %v1683 = vpop.permute.xlu0 %1682
  %v1685 = vadd.f32 %v1665, %v1683
  %v1686 = vtanh.pop %v1685
  %v1687 = vsub.f32 1.0, %v1675
  %1689 = vrot.lane.b32.xlu0 %v1686, 96
  %v1690 = vpop.permute.xlu0 %1689
  %v1692 = vmul.f32 %v1687, %v1690
  %v1693 = vmul.f32 %v1675, %v1547
  %v1694 = vadd.f32 %v1692, %v1693
  %v1695 = vpack.c.bf16 %v812, %v665
  %v1696 = vpack.c.bf16 %v1106, %v959
  %v1697 = vpack.c.bf16 %v1400, %v1253
  %v1698 = vpack.c.bf16 %v1694, %v1547
  %v1699 = vld [vmem:[%s13] sm:$0xf]
  %v1700 = vld [vmem:[%s13 + $0x4] sm:$0xf]
  %v1701 = vld [vmem:[%s13 + $0x8] sm:$0xf]
  %v1702 = vld [vmem:[%s13 + $0xc] sm:$0xf]
  %v1703 = vld [vmem:[%s14] sm:$0x1]
  %v1705 = vlaneseq
  %v1706 = vshrl.u32 %v1705, 7
  %v1707 = vsub.s32 0, %v1706
  %v1708 = vrot.slane %v1703, %v1707
  %1714 = vrot.lane.b32.xlu0 %v1695, 96
  %v1715 = vpop.permute.xlu0 %1714
  %1716 = vrot.lane.b32.xlu0 %v1696, 96
  %v1717 = vpop.permute.xlu0 %1716
  %1718 = vrot.lane.b32.xlu0 %v1697, 96
  %v1719 = vpop.permute.xlu0 %1718
  %1720 = vrot.lane.b32.xlu0 %v1698, 96
  %v1721 = vpop.permute.xlu0 %1720
  %v1726 = vunpack.c.l.b16 %v1699
  %v1727 = vunpack.c.l.b16 %v1700
  %v1728 = vunpack.c.l.b16 %v1701
  %v1729 = vunpack.c.l.b16 %v1702
  %v1730 = vpack.c.b16 %v1727, %v1726
  %v1731 = vpack.c.b16 %v1729, %v1728
  %v1735 = vsel %vm197, %v1715, 0
  %v1738 = vsel %vm197, %v1717, 0
  %v1741 = vsel %vm197, %v1719, 0
  %v1744 = vsel %vm197, %v1721, 0
  %1746 = vmatprep.subr.bf16.mxu0 0
  %1747 = vmatpush1.bf16.msra.mxu0 0
  %1748 = vmatprep.subr.bf16.mxu0 0
  %1749 = vmatpush1.bf16.msra.mxu0 0
  %1750 = vmatprep.subr.bf16.mxu0 0
  %1751 = vmatpush1.bf16.msra.mxu0 0
  %1752 = vmatprep.subr.bf16.mxu0 0
  %1753 = vmatpush1.bf16.msra.mxu0 0
  %1754 = vmatprep.subr.bf16.mxu0 0
  %1755 = vmatpush1.bf16.msra.mxu0 0
  %1756 = vmatprep.subr.bf16.mxu0 0
  %1757 = vmatpush1.bf16.msra.mxu0 0
  %1758 = vmatprep.subr.bf16.mxu0 0
  %1759 = vmatpush1.bf16.msra.mxu0 %v1731
  %1760 = vmatprep.subr.bf16.mxu0 0
  %1761 = vmatpush1.bf16.msra.mxu0 %v1730
  %1762 = vmatprep.subr.bf16.mxu0 0
  %1763 = vmatpush2.bf16.msra.mxu0 0
  %1764 = vmatprep.subr.bf16.mxu0 0
  %1765 = vmatpush2.bf16.msra.mxu0 0
  %1766 = vmatprep.subr.bf16.mxu0 0
  %1767 = vmatpush2.bf16.msra.mxu0 0
  %1768 = vmatprep.subr.bf16.mxu0 0
  %1769 = vmatpush2.bf16.msra.mxu0 0
  %1770 = vmatprep.subr.bf16.mxu0 0
  %1771 = vmatpush2.bf16.msra.mxu0 0
  %1772 = vmatprep.subr.bf16.mxu0 0
  %1773 = vmatpush2.bf16.msra.mxu0 0
  %1774 = vmatprep.subr.bf16.mxu0 0
  %1775 = vmatpush2.bf16.msra.mxu0 0
  %1776 = vmatprep.subr.bf16.mxu0 0
  %1777 = vmatpush2.bf16.msra.mxu0 0
  %1778 = vmatprep.mubr.bf16.mxu0 0
  %1779 = vmatmul.mubr.bf16.gmra.mxu0 %v1735
  %v1780 = vpop.f32.mrf.mxu0
  %v1781 = vadd.f32 %v1708, %v1780
  %v1782 = vpop.f32.mrf.mxu0
  %v1783 = vpop.f32.mrf.mxu0
  %v1784 = vadd.f32 %v1708, %v1783
  %v1785 = vpop.f32.mrf.mxu0
  %1786 = vmatprep.mubr.bf16.mxu0 0
  %1787 = vmatmul.mubr.bf16.gmra.mxu0 %v1738
  %v1788 = vpop.f32.mrf.mxu0
  %v1789 = vadd.f32 %v1708, %v1788
  %v1790 = vpop.f32.mrf.mxu0
  %v1791 = vpop.f32.mrf.mxu0
  %v1792 = vadd.f32 %v1708, %v1791
  %v1793 = vpop.f32.mrf.mxu0
  %1794 = vmatprep.mubr.bf16.mxu0 0
  %1795 = vmatmul.mubr.bf16.gmra.mxu0 %v1741
  %v1796 = vpop.f32.mrf.mxu0
  %v1797 = vadd.f32 %v1708, %v1796
  %v1798 = vpop.f32.mrf.mxu0
  %v1799 = vpop.f32.mrf.mxu0
  %v1800 = vadd.f32 %v1708, %v1799
  %v1801 = vpop.f32.mrf.mxu0
  %1802 = vmatprep.mubr.bf16.mxu0 0
  %1803 = vmatmul.mubr.bf16.gmra.mxu0 %v1744
  %v1804 = vpop.f32.mrf.mxu0
  %v1805 = vadd.f32 %v1708, %v1804
  %v1806 = vpop.f32.mrf.mxu0
  %v1807 = vpop.f32.mrf.mxu0
  %v1808 = vadd.f32 %v1708, %v1807
  %v1809 = vpop.f32.mrf.mxu0
  %1810 = vdwg.mxu0
  %1811 = vst [vmem:[%s15] sm:$0xff] %v1781
  %1812 = vst [vmem:[%s15 + $0x8] sm:$0xff] %v1784
  %1813 = vst [vmem:[%s15 + $0x10] sm:$0xff] %v1789
  %1814 = vst [vmem:[%s15 + $0x18] sm:$0xff] %v1792
  %1815 = vst [vmem:[%s15 + $0x20] sm:$0xff] %v1797
  %1816 = vst [vmem:[%s15 + $0x28] sm:$0xff] %v1800
  %1817 = vst [vmem:[%s15 + $0x30] sm:$0xff] %v1805
  %1818 = vst [vmem:[%s15 + $0x38] sm:$0xff] %v1808
  // Predicated region
  $region62: #{forward.1} parent=0 // pred_check
    _
  $region63: #{forward.1} parent=0 // pred_check_branch
    %1820 = sbr.rel (0) target = $region65
  $region64: #{forward.1} parent=0 // pred_region
    _
  $region65: #{forward.1} parent=0 // pred_fallthru
    _
  // Predicated region
  $region66: #{forward.1} parent=0 // pred_check
    _
  $region67: #{forward.1} parent=0 // pred_check_branch
    %1822 = sbr.rel (0) target = $region69
  $region68: #{forward.1} parent=0 // pred_region
    _
  $region69: #{forward.1} parent=0 // pred_fallthru
    _

</llo_original>
